<compile_context>
chip_gen: v7x
topology: tpu7x:2x2x1
jax: 0.10.0
libtpu: 0.0.40
codegen_flags: <defaults>
</compile_context>

<pallas_src>
import functools

import jax
import jax.numpy as jnp
from jax import lax
from jax.experimental import pallas as pl
from jax.experimental.pallas import tpu as pltpu

# bf16 matmul inputs (f32 accumulation). Use jnp.float32 for exact-f32 reference parity.
MATMUL_DTYPE = jnp.bfloat16


# ------------------------- fused bidirectional LSTM layer kernel -----------------------

def _bilstm_layer_kernel(mask_ref, x_ref, wih_ref, whh_f_ref, whh_r_ref, b_ref,
                         h0_ref, c0_ref, out_ref, gx_ref, *, hidden):
    """One bidirectional LSTM layer over the full padded sequence (both directions fused).

    mask_ref : [S, B, 1] f32 (1 = valid token, 0 = padding)
    x_ref    : [S, B, In]  (MATMUL_DTYPE)
    wih_ref  : [In, 8H]    both directions' input weights, gate order (i,f,g,o) per dir
    whh_f/r  : [H, 4H]     recurrent weights per direction
    b_ref    : [1, 8H]     (bih + bhh) for both directions
    h0/c0    : [2, B, H]   initial states (dir 0 = forward, dir 1 = reverse)
    out_ref  : [S, B, 2H]  zeros at padded positions, [.., :H]=fwd, [.., H:]=rev
    gx_ref   : [S, B, 8H]  VMEM scratch holding the hoisted input projection
    """
    S, B, In = x_ref.shape
    H = hidden

    # ---- hoisted input projection: ONE throughput-shaped matmul for both directions ----
    x_flat = x_ref[...].reshape(S * B, In)                       # [S*B, In]  (bf16)
    gx = jnp.dot(x_flat, wih_ref[...],
                 preferred_element_type=jnp.float32) + b_ref[...]  # [S*B, 8H] f32
    gx_ref[...] = gx.reshape(S, B, 8 * H)

    # ---- hoist weight loads out of the serial recurrence ----
    whh_f = whh_f_ref[...]
    whh_r = whh_r_ref[...]

    # NOTE: for production sizes, make H a multiple of 128 (lane-aligned gate slices),
    # size B to >=8 sublanes, and block-diag-stack both directions' h into one [2B, 2H]
    # operand so the recurrent matmul fills the MXU.  At H=32/B=2 everything is sub-vreg.
    def cell(gates, c):                                          # gates: [B, 4H] f32
        i_g = jax.nn.sigmoid(gates[:, 0 * H:1 * H])
        f_g = jax.nn.sigmoid(gates[:, 1 * H:2 * H])
        g_g = jnp.tanh(gates[:, 2 * H:3 * H])
        o_g = jax.nn.sigmoid(gates[:, 3 * H:4 * H])
        c_new = f_g * c + i_g * g_g
        h_new = o_g * jnp.tanh(c_new)
        return h_new, c_new

    def step(t, carry):
        hf, cf, hr, cr = carry
        tr = S - 1 - t

        # forward direction processes timestep t
        mf = mask_ref[t] > 0.0                                   # [B, 1] bool
        gxt = gx_ref[t]                                          # [B, 8H]
        gates_f = gxt[:, 0:4 * H] + jnp.dot(hf, whh_f,
                                            preferred_element_type=jnp.float32)
        hf_new, cf_new = cell(gates_f, cf)
        out_ref[t, :, 0:H] = jnp.where(mf, hf_new, 0.0)
        hf = jnp.where(mf, hf_new, hf)
        cf = jnp.where(mf, cf_new, cf)

        # reverse direction processes timestep S-1-t (mask gating makes it start at the
        # last valid token of each sequence, matching packed-sequence semantics)
        mr = mask_ref[tr] > 0.0
        gxr = gx_ref[tr]
        gates_r = gxr[:, 4 * H:8 * H] + jnp.dot(hr, whh_r,
                                                preferred_element_type=jnp.float32)
        hr_new, cr_new = cell(gates_r, cr)
        out_ref[tr, :, H:2 * H] = jnp.where(mr, hr_new, 0.0)
        hr = jnp.where(mr, hr_new, hr)
        cr = jnp.where(mr, cr_new, cr)
        return hf, cf, hr, cr

    lax.fori_loop(0, S, step, (h0_ref[0], c0_ref[0], h0_ref[1], c0_ref[1]))


def bilstm_layer(x_tm, mask_tm, lp, h0, c0):
    """x_tm: [S, B, In] f32 (time-major), mask_tm: [S, B, 1] f32, h0/c0: [2, B, H].
    Returns [S, B, 2H] f32."""
    S, B, _ = x_tm.shape
    H = h0.shape[-1]
    vmem = pl.BlockSpec(memory_space=pltpu.MemorySpace.VMEM)
    # TODO(synk): for long sequences / v7x (64 MiB VMEM), add a time-chunk grid axis
    # (BlockSpec (Ts,B,*) blocks, h/c carried in VMEM scratch) and/or split the two
    # directions over a grid=(2,) "parallel" axis to use both TensorCores.
    return pl.pallas_call(
        functools.partial(_bilstm_layer_kernel, hidden=H),
        out_shape=jax.ShapeDtypeStruct((S, B, 2 * H), jnp.float32),
        in_specs=[vmem] * 8,
        out_specs=vmem,
        scratch_shapes=[pltpu.VMEM((S, B, 8 * H), jnp.float32)],
        compiler_params=pltpu.CompilerParams(vmem_limit_bytes=48 * 1024 * 1024),
    )(mask_tm, x_tm.astype(MATMUL_DTYPE), lp["wih_all"], lp["whh_f"], lp["whh_r"],
      lp["b_all"], h0, c0)


# --------------------------- label-attention classifier kernel ------------------------

def _label_attn_kernel(mask_ref, x_ref, a_ref, w1_ref, b1_ref, w2_ref, b2_ref, out_ref):
    """Whole batch in one invocation.

    mask_ref: [B, S] f32    x_ref: [S, B, 2H] f32 (time-major)
    a_ref:    [L, 2H]       w1: [2H, Dm]  b1: [1, Dm]  w2: [Dm, 1]  b2: [1, 1]
    out_ref:  [B, L] f32 (lane-dense)
    """
    S, B, D2 = x_ref.shape
    L = a_ref.shape[0]
    x = x_ref[...]                                               # [S, B, D2] f32
    m = mask_ref[...]                                            # [B, S] f32
    a = a_ref[...].astype(MATMUL_DTYPE)
    w1 = w1_ref[...].astype(MATMUL_DTYPE)
    w2 = w2_ref[...].astype(MATMUL_DTYPE)
    b1 = b1_ref[...]
    b2 = b2_ref[...]

    ctxs = []
    for b in range(B):                                           # static unroll (B tiny)
        xb = x[:, b, :]                                          # [S, D2]
        xb_mm = xb.astype(MATMUL_DTYPE)
        bias = jnp.where(m[b:b + 1, :] > 0.0, 0.0, -1e9)         # [1, S] mask built in-kernel
        scores = lax.dot_general(a, xb_mm, (((1,), (1,)), ((), ())),
                                 preferred_element_type=jnp.float32)       # [L, S]
        scores = scores + bias
        scores = scores - jnp.max(scores, axis=-1, keepdims=True)
        e = jnp.exp(scores)
        attn = e * pl.reciprocal(jnp.sum(e, axis=-1, keepdims=True), approx=True)
        ctxs.append(jnp.dot(attn.astype(MATMUL_DTYPE), xb_mm,
                            preferred_element_type=jnp.float32))           # [L, D2]

    ctx = jnp.concatenate(ctxs, axis=0)                          # [B*L, D2]
    hid = jnp.maximum(jnp.dot(ctx.astype(MATMUL_DTYPE), w1,
                              preferred_element_type=jnp.float32) + b1, 0.0)  # [B*L, Dm]
    rows = []
    for b in range(B):
        hid_b = hid[b * L:(b + 1) * L, :]                        # [L, Dm]
        lg = jnp.dot(hid_b.astype(MATMUL_DTYPE), w2,
                     preferred_element_type=jnp.float32) + b2    # [L, 1]
        rows.append(jnp.transpose(lg))                           # [1, L]
    out_ref[...] = jnp.concatenate(rows, axis=0)                 # [B, L]


def label_attention_classifier(x_tm, maskf, attn_w, w1, b1, w2, b2):
    """x_tm: [S, B, 2H] f32 (time-major), maskf: [B, S] f32.  Returns logits [B, L]."""
    _, B, _ = x_tm.shape
    L = attn_w.shape[0]
    vmem = pl.BlockSpec(memory_space=pltpu.MemorySpace.VMEM)
    return pl.pallas_call(
        _label_attn_kernel,
        out_shape=jax.ShapeDtypeStruct((B, L), jnp.float32),
        in_specs=[vmem] * 7,
        out_specs=vmem,
    )(maskf, x_tm, attn_w, w1, b1, w2, b2)


# ------------------------------------ full forward -------------------------------------

def lstm_classifier_forward(params, input_ids, input_mask, *, hidden, num_layers):
    B, _ = input_ids.shape
    maskf = input_mask.astype(jnp.float32)                       # [B, S]
    mask_tm = jnp.transpose(maskf, (1, 0))[:, :, None]           # [S, B, 1]
    # embedding lookup (gather) -- plain-JAX glue; dropout (eval mode) -> identity
    x = jnp.take(params["embedding"], input_ids, axis=0)         # [B, S, E]
    h = jnp.transpose(x, (1, 0, 2))                              # time-major once: [S, B, E]
    for layer in range(num_layers):
        h0 = jnp.broadcast_to(params["h0"][2 * layer:2 * layer + 2], (2, B, hidden))
        c0 = jnp.broadcast_to(params["c0"][2 * layer:2 * layer + 2], (2, B, hidden))
        h = bilstm_layer(h, mask_tm, params["lstm"][layer], h0, c0)   # [S, B, 2H]
    c = params["cls"]
    return label_attention_classifier(h, maskf, c["attn_w"], c["w1"], c["b1"],
                                      c["w2"], c["b2"])


# ------------------------------------ parameter init -----------------------------------

def init_params(key, *, vocab, embed, hidden, num_layers, num_labels, mlp_hidden,
                padding_idx):
    keys = iter(jax.random.split(key, 128))

    def unif(shape, scale):
        return jax.random.uniform(next(keys), shape, jnp.float32, -scale, scale)

    k = 1.0 / float(hidden) ** 0.5
    emb = jax.random.normal(next(keys), (vocab, embed), jnp.float32) * 0.1
    emb = emb.at[padding_idx].set(0.0)

    lstm = []
    for layer in range(num_layers):
        in_size = embed if layer == 0 else 2 * hidden
        wih_ts, whhs, bs = [], [], []
        for _ in range(2):                                       # forward, reverse
            wih = unif((4 * hidden, in_size), k)
            whh = unif((4 * hidden, hidden), k)
            bih = unif((4 * hidden,), k)
            bhh = unif((4 * hidden,), k)
            wih_ts.append(wih.T)                                 # [In, 4H]
            whhs.append(whh.T)                                   # [H, 4H]
            bs.append(bih + bhh)
        lstm.append(dict(
            wih_all=jnp.concatenate(wih_ts, axis=1).astype(MATMUL_DTYPE),  # [In, 8H]
            whh_f=whhs[0], whh_r=whhs[1],
            b_all=jnp.concatenate(bs)[None, :],                            # [1, 8H]
        ))

    h2 = 2 * hidden
    ka = 1.0 / float(h2) ** 0.5
    km = 1.0 / float(mlp_hidden) ** 0.5
    cls = dict(
        attn_w=unif((num_labels, h2), ka),
        w1=unif((h2, mlp_hidden), ka),
        b1=unif((1, mlp_hidden), ka),
        w2=unif((mlp_hidden, 1), km),
        b2=unif((1, 1), km),
    )

    return dict(
        embedding=emb,
        lstm=lstm,
        h0=jnp.zeros((num_layers * 2, 1, hidden), jnp.float32),  # nn.Parameter zeros
        c0=jnp.zeros((num_layers * 2, 1, hidden), jnp.float32),
        cls=cls,
    )


# ------------------------------------------ main ---------------------------------------

if __name__ == "__main__":
    VOCAB, EMBED, HIDDEN, LAYERS = 50, 16, 32, 2
    NUM_LABELS, MLP_HIDDEN, PAD_IDX = 8, 32, 0
    B, S = 2, 8

    key = jax.random.PRNGKey(0)
    pkey, ikey = jax.random.split(key)
    params = init_params(pkey, vocab=VOCAB, embed=EMBED, hidden=HIDDEN,
                         num_layers=LAYERS, num_labels=NUM_LABELS,
                         mlp_hidden=MLP_HIDDEN, padding_idx=PAD_IDX)

    lengths = jnp.array([8, 5], dtype=jnp.int32)
    input_ids = jax.random.randint(ikey, (B, S), 1, VOCAB, dtype=jnp.int32)
    input_mask = jnp.arange(S, dtype=jnp.int32)[None, :] < lengths[:, None]
    input_ids = jnp.where(input_mask, input_ids, PAD_IDX)

    fwd = jax.jit(functools.partial(lstm_classifier_forward,
                                    hidden=HIDDEN, num_layers=LAYERS))
    logits = fwd(params, input_ids, input_mask)
    jax.block_until_ready(logits)
    assert logits.shape == (B, NUM_LABELS), logits.shape
    assert bool(jnp.all(jnp.isfinite(logits)))
    print("KERNEL_OK")
</pallas_src>

<mosaic_0001>
module attributes {stable_mosaic.version = 11 : i64} {
  func.func @_bilstm_layer_kernel(%arg0: memref<8x2x1xf32, #tpu.memory_space<vmem>>, %arg1: memref<8x2x16xbf16, #tpu.memory_space<vmem>>, %arg2: memref<16x256xbf16, #tpu.memory_space<vmem>>, %arg3: memref<32x128xf32, #tpu.memory_space<vmem>>, %arg4: memref<32x128xf32, #tpu.memory_space<vmem>>, %arg5: memref<1x256xf32, #tpu.memory_space<vmem>>, %arg6: memref<2x2x32xf32, #tpu.memory_space<vmem>>, %arg7: memref<2x2x32xf32, #tpu.memory_space<vmem>>, %arg8: memref<8x2x64xf32, #tpu.memory_space<vmem>>, %arg9: memref<8x2x256xf32, #tpu.memory_space<vmem>>) attributes {dimension_semantics = [], scalar_prefetch = 0 : i64, scratch_operands = 1 : i64, tpu.core_type = #tpu.core_type<tc>} {
    %c0 = arith.constant 0 : index
    %c0_0 = arith.constant 0 : index
    %c0_1 = arith.constant 0 : index
    %0 = vector.load %arg1[%c0, %c0_0, %c0_1] : memref<8x2x16xbf16, #tpu.memory_space<vmem>>, vector<8x2x16xbf16>
    %1 = vector.shape_cast %0 : vector<8x2x16xbf16> to vector<16x16xbf16>
    %c0_2 = arith.constant 0 : index
    %c0_3 = arith.constant 0 : index
    %2 = vector.load %arg2[%c0_2, %c0_3] : memref<16x256xbf16, #tpu.memory_space<vmem>>, vector<16x256xbf16>
    %cst = arith.constant dense<0.000000e+00> : vector<16x256xf32>
    %3 = tpu.matmul %1, %2, %cst {dimension_numbers = #tpu.dot_dimension_numbers<[1], [0], [0], [1], [0, 0, 1, 1], [], []>} : vector<16x16xbf16>, vector<16x256xbf16>, vector<16x256xf32> -> vector<16x256xf32>
    %c0_4 = arith.constant 0 : index
    %c0_5 = arith.constant 0 : index
    %4 = vector.load %arg5[%c0_4, %c0_5] : memref<1x256xf32, #tpu.memory_space<vmem>>, vector<1x256xf32>
    %5 = vector.broadcast %4 : vector<1x256xf32> to vector<16x256xf32>
    %6 = arith.addf %3, %5 : vector<16x256xf32>
    %7 = vector.shape_cast %6 : vector<16x256xf32> to vector<8x2x256xf32>
    %c0_6 = arith.constant 0 : index
    %c0_7 = arith.constant 0 : index
    %c0_8 = arith.constant 0 : index
    %8 = vector.load %arg9[%c0_6, %c0_7, %c0_8] : memref<8x2x256xf32, #tpu.memory_space<vmem>>, vector<8x2x256xf32>
    tpu.vector_store %arg9[%c0_6, %c0_7, %c0_8], %7 {strides = array<i32>} : memref<8x2x256xf32, #tpu.memory_space<vmem>>, vector<8x2x256xf32>,
    %c0_9 = arith.constant 0 : index
    %c0_10 = arith.constant 0 : index
    %9 = vector.load %arg3[%c0_9, %c0_10] : memref<32x128xf32, #tpu.memory_space<vmem>>, vector<32x128xf32>
    %c0_11 = arith.constant 0 : index
    %c0_12 = arith.constant 0 : index
    %10 = vector.load %arg4[%c0_11, %c0_12] : memref<32x128xf32, #tpu.memory_space<vmem>>, vector<32x128xf32>
    %c0_13 = arith.constant 0 : index
    %c0_14 = arith.constant 0 : index
    %c0_15 = arith.constant 0 : index
    %11 = vector.load %arg6[%c0_13, %c0_14, %c0_15] : memref<2x2x32xf32, #tpu.memory_space<vmem>>, vector<1x2x32xf32>
    %12 = vector.shape_cast %11 : vector<1x2x32xf32> to vector<2x32xf32>
    %c0_16 = arith.constant 0 : index
    %c0_17 = arith.constant 0 : index
    %c0_18 = arith.constant 0 : index
    %13 = vector.load %arg7[%c0_16, %c0_17, %c0_18] : memref<2x2x32xf32, #tpu.memory_space<vmem>>, vector<1x2x32xf32>
    %14 = vector.shape_cast %13 : vector<1x2x32xf32> to vector<2x32xf32>
    %c1 = arith.constant 1 : index
    %c0_19 = arith.constant 0 : index
    %c0_20 = arith.constant 0 : index
    %15 = vector.load %arg6[%c1, %c0_19, %c0_20] : memref<2x2x32xf32, #tpu.memory_space<vmem>>, vector<1x2x32xf32>
    %16 = vector.shape_cast %15 : vector<1x2x32xf32> to vector<2x32xf32>
    %c1_21 = arith.constant 1 : index
    %c0_22 = arith.constant 0 : index
    %c0_23 = arith.constant 0 : index
    %17 = vector.load %arg7[%c1_21, %c0_22, %c0_23] : memref<2x2x32xf32, #tpu.memory_space<vmem>>, vector<1x2x32xf32>
    %18 = vector.shape_cast %17 : vector<1x2x32xf32> to vector<2x32xf32>
    %c0_i32 = arith.constant 0 : i32
    %c8_i32 = arith.constant 8 : i32
    %19 = arith.addi %c0_i32, %c8_i32 : i32
    %c1_i32 = arith.constant 1 : i32
    %20:4 = scf.for %arg10 = %c0_i32 to %19 step %c1_i32 iter_args(%arg11 = %12, %arg12 = %14, %arg13 = %16, %arg14 = %18) -> (vector<2x32xf32>, vector<2x32xf32>, vector<2x32xf32>, vector<2x32xf32>)  : i32 {
      %c7_i32 = arith.constant 7 : i32
      %21 = arith.subi %c7_i32, %arg10 : i32
      %22 = arith.index_cast %arg10 : i32 to index
      %c0_25 = arith.constant 0 : index
      %c0_26 = arith.constant 0 : index
      %23 = vector.load %arg0[%22, %c0_25, %c0_26] : memref<8x2x1xf32, #tpu.memory_space<vmem>>, vector<1x2x1xf32>
      %24 = vector.shape_cast %23 : vector<1x2x1xf32> to vector<2x1xf32>
      %cst_27 = arith.constant 0.000000e+00 : f32
      %25 = vector.broadcast %cst_27 : f32 to vector<2x1xf32>
      %26 = arith.cmpf ogt, %24, %25 : vector<2x1xf32>
      %27 = arith.index_cast %arg10 : i32 to index
      %c0_28 = arith.constant 0 : index
      %c0_29 = arith.constant 0 : index
      %28 = vector.load %arg9[%27, %c0_28, %c0_29] : memref<8x2x256xf32, #tpu.memory_space<vmem>>, vector<1x2x256xf32>
      %29 = vector.shape_cast %28 : vector<1x2x256xf32> to vector<2x256xf32>
      %30 = vector.extract_strided_slice %29 {offsets = [0, 0], sizes = [2, 128], strides = [1, 1]} : vector<2x256xf32> to vector<2x128xf32>
      %cst_30 = arith.constant dense<0.000000e+00> : vector<2x128xf32>
      %31 = tpu.matmul %arg11, %9, %cst_30 {dimension_numbers = #tpu.dot_dimension_numbers<[1], [0], [0], [1], [0, 0, 1, 1], [], []>} : vector<2x32xf32>, vector<32x128xf32>, vector<2x128xf32> -> vector<2x128xf32>
      %32 = arith.addf %30, %31 : vector<2x128xf32>
      %33 = vector.extract_strided_slice %32 {offsets = [0, 0], sizes = [2, 32], strides = [1, 1]} : vector<2x128xf32> to vector<2x32xf32>
      %34 = arith.negf %33 : vector<2x32xf32>
      %35 = math.exp %34 : vector<2x32xf32>
      %cst_31 = arith.constant 1.000000e+00 : f32
      %36 = vector.broadcast %cst_31 : f32 to vector<2x32xf32>
      %37 = arith.addf %36, %35 : vector<2x32xf32>
      %38 = arith.divf %36, %37 : vector<2x32xf32>
      %39 = vector.extract_strided_slice %32 {offsets = [0, 32], sizes = [2, 32], strides = [1, 1]} : vector<2x128xf32> to vector<2x32xf32>
      %40 = arith.negf %39 : vector<2x32xf32>
      %41 = math.exp %40 : vector<2x32xf32>
      %cst_32 = arith.constant 1.000000e+00 : f32
      %42 = vector.broadcast %cst_32 : f32 to vector<2x32xf32>
      %43 = arith.addf %42, %41 : vector<2x32xf32>
      %44 = arith.divf %42, %43 : vector<2x32xf32>
      %45 = vector.extract_strided_slice %32 {offsets = [0, 64], sizes = [2, 32], strides = [1, 1]} : vector<2x128xf32> to vector<2x32xf32>
      %46 = math.tanh %45 : vector<2x32xf32>
      %47 = vector.extract_strided_slice %32 {offsets = [0, 96], sizes = [2, 32], strides = [1, 1]} : vector<2x128xf32> to vector<2x32xf32>
      %48 = arith.negf %47 : vector<2x32xf32>
      %49 = math.exp %48 : vector<2x32xf32>
      %cst_33 = arith.constant 1.000000e+00 : f32
      %50 = vector.broadcast %cst_33 : f32 to vector<2x32xf32>
      %51 = arith.addf %50, %49 : vector<2x32xf32>
      %52 = arith.divf %50, %51 : vector<2x32xf32>
      %53 = arith.mulf %44, %arg12 : vector<2x32xf32>
      %54 = arith.mulf %38, %46 : vector<2x32xf32>
      %55 = arith.addf %53, %54 : vector<2x32xf32>
      %56 = math.tanh %55 : vector<2x32xf32>
      %57 = arith.mulf %52, %56 : vector<2x32xf32>
      %cst_34 = arith.constant 0.000000e+00 : f32
      %58 = vector.shape_cast %26 : vector<2x1xi1> to vector<2x1xi1>
      %59 = vector.broadcast %58 : vector<2x1xi1> to vector<2x32xi1>
      %60 = vector.broadcast %cst_34 : f32 to vector<2x32xf32>
      %61 = arith.select %59, %57, %60 : vector<2x32xi1>, vector<2x32xf32>
      %62 = arith.index_cast %arg10 : i32 to index
      %c0_35 = arith.constant 0 : index
      %c0_36 = arith.constant 0 : index
      %63 = vector.load %arg8[%62, %c0_35, %c0_36] : memref<8x2x64xf32, #tpu.memory_space<vmem>>, vector<1x2x32xf32>
      %64 = vector.shape_cast %63 : vector<1x2x32xf32> to vector<2x32xf32>
      %65 = vector.shape_cast %61 : vector<2x32xf32> to vector<1x2x32xf32>
      tpu.vector_store %arg8[%62, %c0_35, %c0_36], %65 {strides = array<i32>} : memref<8x2x64xf32, #tpu.memory_space<vmem>>, vector<1x2x32xf32>,
      %66 = vector.shape_cast %26 : vector<2x1xi1> to vector<2x1xi1>
      %67 = vector.broadcast %66 : vector<2x1xi1> to vector<2x32xi1>
      %68 = arith.select %67, %57, %arg11 : vector<2x32xi1>, vector<2x32xf32>
      %69 = vector.shape_cast %26 : vector<2x1xi1> to vector<2x1xi1>
      %70 = vector.broadcast %69 : vector<2x1xi1> to vector<2x32xi1>
      %71 = arith.select %70, %55, %arg12 : vector<2x32xi1>, vector<2x32xf32>
      %72 = arith.index_cast %21 : i32 to index
      %c0_37 = arith.constant 0 : index
      %c0_38 = arith.constant 0 : index
      %73 = vector.load %arg0[%72, %c0_37, %c0_38] : memref<8x2x1xf32, #tpu.memory_space<vmem>>, vector<1x2x1xf32>
      %74 = vector.shape_cast %73 : vector<1x2x1xf32> to vector<2x1xf32>
      %cst_39 = arith.constant 0.000000e+00 : f32
      %75 = vector.broadcast %cst_39 : f32 to vector<2x1xf32>
      %76 = arith.cmpf ogt, %74, %75 : vector<2x1xf32>
      %77 = arith.index_cast %21 : i32 to index
      %c0_40 = arith.constant 0 : index
      %c0_41 = arith.constant 0 : index
      %78 = vector.load %arg9[%77, %c0_40, %c0_41] : memref<8x2x256xf32, #tpu.memory_space<vmem>>, vector<1x2x256xf32>
      %79 = vector.shape_cast %78 : vector<1x2x256xf32> to vector<2x256xf32>
      %80 = vector.extract_strided_slice %79 {offsets = [0, 128], sizes = [2, 128], strides = [1, 1]} : vector<2x256xf32> to vector<2x128xf32>
      %cst_42 = arith.constant dense<0.000000e+00> : vector<2x128xf32>
      %81 = tpu.matmul %arg13, %10, %cst_42 {dimension_numbers = #tpu.dot_dimension_numbers<[1], [0], [0], [1], [0, 0, 1, 1], [], []>} : vector<2x32xf32>, vector<32x128xf32>, vector<2x128xf32> -> vector<2x128xf32>
      %82 = arith.addf %80, %81 : vector<2x128xf32>
      %83 = vector.extract_strided_slice %82 {offsets = [0, 0], sizes = [2, 32], strides = [1, 1]} : vector<2x128xf32> to vector<2x32xf32>
      %84 = arith.negf %83 : vector<2x32xf32>
      %85 = math.exp %84 : vector<2x32xf32>
      %cst_43 = arith.constant 1.000000e+00 : f32
      %86 = vector.broadcast %cst_43 : f32 to vector<2x32xf32>
      %87 = arith.addf %86, %85 : vector<2x32xf32>
      %88 = arith.divf %86, %87 : vector<2x32xf32>
      %89 = vector.extract_strided_slice %82 {offsets = [0, 32], sizes = [2, 32], strides = [1, 1]} : vector<2x128xf32> to vector<2x32xf32>
      %90 = arith.negf %89 : vector<2x32xf32>
      %91 = math.exp %90 : vector<2x32xf32>
      %cst_44 = arith.constant 1.000000e+00 : f32
      %92 = vector.broadcast %cst_44 : f32 to vector<2x32xf32>
      %93 = arith.addf %92, %91 : vector<2x32xf32>
      %94 = arith.divf %92, %93 : vector<2x32xf32>
      %95 = vector.extract_strided_slice %82 {offsets = [0, 64], sizes = [2, 32], strides = [1, 1]} : vector<2x128xf32> to vector<2x32xf32>
      %96 = math.tanh %95 : vector<2x32xf32>
      %97 = vector.extract_strided_slice %82 {offsets = [0, 96], sizes = [2, 32], strides = [1, 1]} : vector<2x128xf32> to vector<2x32xf32>
      %98 = arith.negf %97 : vector<2x32xf32>
      %99 = math.exp %98 : vector<2x32xf32>
      %cst_45 = arith.constant 1.000000e+00 : f32
      %100 = vector.broadcast %cst_45 : f32 to vector<2x32xf32>
      %101 = arith.addf %100, %99 : vector<2x32xf32>
      %102 = arith.divf %100, %101 : vector<2x32xf32>
      %103 = arith.mulf %94, %arg14 : vector<2x32xf32>
      %104 = arith.mulf %88, %96 : vector<2x32xf32>
      %105 = arith.addf %103, %104 : vector<2x32xf32>
      %106 = math.tanh %105 : vector<2x32xf32>
      %107 = arith.mulf %102, %106 : vector<2x32xf32>
      %cst_46 = arith.constant 0.000000e+00 : f32
      %108 = vector.shape_cast %76 : vector<2x1xi1> to vector<2x1xi1>
      %109 = vector.broadcast %108 : vector<2x1xi1> to vector<2x32xi1>
      %110 = vector.broadcast %cst_46 : f32 to vector<2x32xf32>
      %111 = arith.select %109, %107, %110 : vector<2x32xi1>, vector<2x32xf32>
      %112 = arith.index_cast %21 : i32 to index
      %c0_47 = arith.constant 0 : index
      %c32 = arith.constant 32 : index
      %113 = vector.load %arg8[%112, %c0_47, %c32] : memref<8x2x64xf32, #tpu.memory_space<vmem>>, vector<1x2x32xf32>
      %114 = vector.shape_cast %113 : vector<1x2x32xf32> to vector<2x32xf32>
      %115 = vector.shape_cast %111 : vector<2x32xf32> to vector<1x2x32xf32>
      tpu.vector_store %arg8[%112, %c0_47, %c32], %115 {strides = array<i32>} : memref<8x2x64xf32, #tpu.memory_space<vmem>>, vector<1x2x32xf32>,
      %116 = vector.shape_cast %76 : vector<2x1xi1> to vector<2x1xi1>
      %117 = vector.broadcast %116 : vector<2x1xi1> to vector<2x32xi1>
      %118 = arith.select %117, %107, %arg13 : vector<2x32xi1>, vector<2x32xf32>
      %119 = vector.shape_cast %76 : vector<2x1xi1> to vector<2x1xi1>
      %120 = vector.broadcast %119 : vector<2x1xi1> to vector<2x32xi1>
      %121 = arith.select %120, %105, %arg14 : vector<2x32xi1>, vector<2x32xf32>
      scf.yield %68, %71, %118, %121 : vector<2x32xf32>, vector<2x32xf32>, vector<2x32xf32>, vector<2x32xf32>
    }
    %c8_i32_24 = arith.constant 8 : i32
    return
  }
}

module attributes {stable_mosaic.version = 11 : i64} {
  func.func @_bilstm_layer_kernel(%arg0: memref<8x2x1xf32, #tpu.memory_space<vmem>>, %arg1: memref<8x2x64xbf16, #tpu.memory_space<vmem>>, %arg2: memref<64x256xbf16, #tpu.memory_space<vmem>>, %arg3: memref<32x128xf32, #tpu.memory_space<vmem>>, %arg4: memref<32x128xf32, #tpu.memory_space<vmem>>, %arg5: memref<1x256xf32, #tpu.memory_space<vmem>>, %arg6: memref<2x2x32xf32, #tpu.memory_space<vmem>>, %arg7: memref<2x2x32xf32, #tpu.memory_space<vmem>>, %arg8: memref<8x2x64xf32, #tpu.memory_space<vmem>>, %arg9: memref<8x2x256xf32, #tpu.memory_space<vmem>>) attributes {dimension_semantics = [], scalar_prefetch = 0 : i64, scratch_operands = 1 : i64, tpu.core_type = #tpu.core_type<tc>} {
    %c0 = arith.constant 0 : index
    %c0_0 = arith.constant 0 : index
    %c0_1 = arith.constant 0 : index
    %0 = vector.load %arg1[%c0, %c0_0, %c0_1] : memref<8x2x64xbf16, #tpu.memory_space<vmem>>, vector<8x2x64xbf16>
    %1 = vector.shape_cast %0 : vector<8x2x64xbf16> to vector<16x64xbf16>
    %c0_2 = arith.constant 0 : index
    %c0_3 = arith.constant 0 : index
    %2 = vector.load %arg2[%c0_2, %c0_3] : memref<64x256xbf16, #tpu.memory_space<vmem>>, vector<64x256xbf16>
    %cst = arith.constant dense<0.000000e+00> : vector<16x256xf32>
    %3 = tpu.matmul %1, %2, %cst {dimension_numbers = #tpu.dot_dimension_numbers<[1], [0], [0], [1], [0, 0, 1, 1], [], []>} : vector<16x64xbf16>, vector<64x256xbf16>, vector<16x256xf32> -> vector<16x256xf32>
    %c0_4 = arith.constant 0 : index
    %c0_5 = arith.constant 0 : index
    %4 = vector.load %arg5[%c0_4, %c0_5] : memref<1x256xf32, #tpu.memory_space<vmem>>, vector<1x256xf32>
    %5 = vector.broadcast %4 : vector<1x256xf32> to vector<16x256xf32>
    %6 = arith.addf %3, %5 : vector<16x256xf32>
    %7 = vector.shape_cast %6 : vector<16x256xf32> to vector<8x2x256xf32>
    %c0_6 = arith.constant 0 : index
    %c0_7 = arith.constant 0 : index
    %c0_8 = arith.constant 0 : index
    %8 = vector.load %arg9[%c0_6, %c0_7, %c0_8] : memref<8x2x256xf32, #tpu.memory_space<vmem>>, vector<8x2x256xf32>
    tpu.vector_store %arg9[%c0_6, %c0_7, %c0_8], %7 {strides = array<i32>} : memref<8x2x256xf32, #tpu.memory_space<vmem>>, vector<8x2x256xf32>,
    %c0_9 = arith.constant 0 : index
    %c0_10 = arith.constant 0 : index
    %9 = vector.load %arg3[%c0_9, %c0_10] : memref<32x128xf32, #tpu.memory_space<vmem>>, vector<32x128xf32>
    %c0_11 = arith.constant 0 : index
    %c0_12 = arith.constant 0 : index
    %10 = vector.load %arg4[%c0_11, %c0_12] : memref<32x128xf32, #tpu.memory_space<vmem>>, vector<32x128xf32>
    %c0_13 = arith.constant 0 : index
    %c0_14 = arith.constant 0 : index
    %c0_15 = arith.constant 0 : index
    %11 = vector.load %arg6[%c0_13, %c0_14, %c0_15] : memref<2x2x32xf32, #tpu.memory_space<vmem>>, vector<1x2x32xf32>
    %12 = vector.shape_cast %11 : vector<1x2x32xf32> to vector<2x32xf32>
    %c0_16 = arith.constant 0 : index
    %c0_17 = arith.constant 0 : index
    %c0_18 = arith.constant 0 : index
    %13 = vector.load %arg7[%c0_16, %c0_17, %c0_18] : memref<2x2x32xf32, #tpu.memory_space<vmem>>, vector<1x2x32xf32>
    %14 = vector.shape_cast %13 : vector<1x2x32xf32> to vector<2x32xf32>
    %c1 = arith.constant 1 : index
    %c0_19 = arith.constant 0 : index
    %c0_20 = arith.constant 0 : index
    %15 = vector.load %arg6[%c1, %c0_19, %c0_20] : memref<2x2x32xf32, #tpu.memory_space<vmem>>, vector<1x2x32xf32>
    %16 = vector.shape_cast %15 : vector<1x2x32xf32> to vector<2x32xf32>
    %c1_21 = arith.constant 1 : index
    %c0_22 = arith.constant 0 : index
    %c0_23 = arith.constant 0 : index
    %17 = vector.load %arg7[%c1_21, %c0_22, %c0_23] : memref<2x2x32xf32, #tpu.memory_space<vmem>>, vector<1x2x32xf32>
    %18 = vector.shape_cast %17 : vector<1x2x32xf32> to vector<2x32xf32>
    %c0_i32 = arith.constant 0 : i32
    %c8_i32 = arith.constant 8 : i32
    %19 = arith.addi %c0_i32, %c8_i32 : i32
    %c1_i32 = arith.constant 1 : i32
    %20:4 = scf.for %arg10 = %c0_i32 to %19 step %c1_i32 iter_args(%arg11 = %12, %arg12 = %14, %arg13 = %16, %arg14 = %18) -> (vector<2x32xf32>, vector<2x32xf32>, vector<2x32xf32>, vector<2x32xf32>)  : i32 {
      %c7_i32 = arith.constant 7 : i32
      %21 = arith.subi %c7_i32, %arg10 : i32
      %22 = arith.index_cast %arg10 : i32 to index
      %c0_25 = arith.constant 0 : index
      %c0_26 = arith.constant 0 : index
      %23 = vector.load %arg0[%22, %c0_25, %c0_26] : memref<8x2x1xf32, #tpu.memory_space<vmem>>, vector<1x2x1xf32>
      %24 = vector.shape_cast %23 : vector<1x2x1xf32> to vector<2x1xf32>
      %cst_27 = arith.constant 0.000000e+00 : f32
      %25 = vector.broadcast %cst_27 : f32 to vector<2x1xf32>
      %26 = arith.cmpf ogt, %24, %25 : vector<2x1xf32>
      %27 = arith.index_cast %arg10 : i32 to index
      %c0_28 = arith.constant 0 : index
      %c0_29 = arith.constant 0 : index
      %28 = vector.load %arg9[%27, %c0_28, %c0_29] : memref<8x2x256xf32, #tpu.memory_space<vmem>>, vector<1x2x256xf32>
      %29 = vector.shape_cast %28 : vector<1x2x256xf32> to vector<2x256xf32>
      %30 = vector.extract_strided_slice %29 {offsets = [0, 0], sizes = [2, 128], strides = [1, 1]} : vector<2x256xf32> to vector<2x128xf32>
      %cst_30 = arith.constant dense<0.000000e+00> : vector<2x128xf32>
      %31 = tpu.matmul %arg11, %9, %cst_30 {dimension_numbers = #tpu.dot_dimension_numbers<[1], [0], [0], [1], [0, 0, 1, 1], [], []>} : vector<2x32xf32>, vector<32x128xf32>, vector<2x128xf32> -> vector<2x128xf32>
      %32 = arith.addf %30, %31 : vector<2x128xf32>
      %33 = vector.extract_strided_slice %32 {offsets = [0, 0], sizes = [2, 32], strides = [1, 1]} : vector<2x128xf32> to vector<2x32xf32>
      %34 = arith.negf %33 : vector<2x32xf32>
      %35 = math.exp %34 : vector<2x32xf32>
      %cst_31 = arith.constant 1.000000e+00 : f32
      %36 = vector.broadcast %cst_31 : f32 to vector<2x32xf32>
      %37 = arith.addf %36, %35 : vector<2x32xf32>
      %38 = arith.divf %36, %37 : vector<2x32xf32>
      %39 = vector.extract_strided_slice %32 {offsets = [0, 32], sizes = [2, 32], strides = [1, 1]} : vector<2x128xf32> to vector<2x32xf32>
      %40 = arith.negf %39 : vector<2x32xf32>
      %41 = math.exp %40 : vector<2x32xf32>
      %cst_32 = arith.constant 1.000000e+00 : f32
      %42 = vector.broadcast %cst_32 : f32 to vector<2x32xf32>
      %43 = arith.addf %42, %41 : vector<2x32xf32>
      %44 = arith.divf %42, %43 : vector<2x32xf32>
      %45 = vector.extract_strided_slice %32 {offsets = [0, 64], sizes = [2, 32], strides = [1, 1]} : vector<2x128xf32> to vector<2x32xf32>
      %46 = math.tanh %45 : vector<2x32xf32>
      %47 = vector.extract_strided_slice %32 {offsets = [0, 96], sizes = [2, 32], strides = [1, 1]} : vector<2x128xf32> to vector<2x32xf32>
      %48 = arith.negf %47 : vector<2x32xf32>
      %49 = math.exp %48 : vector<2x32xf32>
      %cst_33 = arith.constant 1.000000e+00 : f32
      %50 = vector.broadcast %cst_33 : f32 to vector<2x32xf32>
      %51 = arith.addf %50, %49 : vector<2x32xf32>
      %52 = arith.divf %50, %51 : vector<2x32xf32>
      %53 = arith.mulf %44, %arg12 : vector<2x32xf32>
      %54 = arith.mulf %38, %46 : vector<2x32xf32>
      %55 = arith.addf %53, %54 : vector<2x32xf32>
      %56 = math.tanh %55 : vector<2x32xf32>
      %57 = arith.mulf %52, %56 : vector<2x32xf32>
      %cst_34 = arith.constant 0.000000e+00 : f32
      %58 = vector.shape_cast %26 : vector<2x1xi1> to vector<2x1xi1>
      %59 = vector.broadcast %58 : vector<2x1xi1> to vector<2x32xi1>
      %60 = vector.broadcast %cst_34 : f32 to vector<2x32xf32>
      %61 = arith.select %59, %57, %60 : vector<2x32xi1>, vector<2x32xf32>
      %62 = arith.index_cast %arg10 : i32 to index
      %c0_35 = arith.constant 0 : index
      %c0_36 = arith.constant 0 : index
      %63 = vector.load %arg8[%62, %c0_35, %c0_36] : memref<8x2x64xf32, #tpu.memory_space<vmem>>, vector<1x2x32xf32>
      %64 = vector.shape_cast %63 : vector<1x2x32xf32> to vector<2x32xf32>
      %65 = vector.shape_cast %61 : vector<2x32xf32> to vector<1x2x32xf32>
      tpu.vector_store %arg8[%62, %c0_35, %c0_36], %65 {strides = array<i32>} : memref<8x2x64xf32, #tpu.memory_space<vmem>>, vector<1x2x32xf32>,
      %66 = vector.shape_cast %26 : vector<2x1xi1> to vector<2x1xi1>
      %67 = vector.broadcast %66 : vector<2x1xi1> to vector<2x32xi1>
      %68 = arith.select %67, %57, %arg11 : vector<2x32xi1>, vector<2x32xf32>
      %69 = vector.shape_cast %26 : vector<2x1xi1> to vector<2x1xi1>
      %70 = vector.broadcast %69 : vector<2x1xi1> to vector<2x32xi1>
      %71 = arith.select %70, %55, %arg12 : vector<2x32xi1>, vector<2x32xf32>
      %72 = arith.index_cast %21 : i32 to index
      %c0_37 = arith.constant 0 : index
      %c0_38 = arith.constant 0 : index
      %73 = vector.load %arg0[%72, %c0_37, %c0_38] : memref<8x2x1xf32, #tpu.memory_space<vmem>>, vector<1x2x1xf32>
      %74 = vector.shape_cast %73 : vector<1x2x1xf32> to vector<2x1xf32>
      %cst_39 = arith.constant 0.000000e+00 : f32
      %75 = vector.broadcast %cst_39 : f32 to vector<2x1xf32>
      %76 = arith.cmpf ogt, %74, %75 : vector<2x1xf32>
      %77 = arith.index_cast %21 : i32 to index
      %c0_40 = arith.constant 0 : index
      %c0_41 = arith.constant 0 : index
      %78 = vector.load %arg9[%77, %c0_40, %c0_41] : memref<8x2x256xf32, #tpu.memory_space<vmem>>, vector<1x2x256xf32>
      %79 = vector.shape_cast %78 : vector<1x2x256xf32> to vector<2x256xf32>
      %80 = vector.extract_strided_slice %79 {offsets = [0, 128], sizes = [2, 128], strides = [1, 1]} : vector<2x256xf32> to vector<2x128xf32>
      %cst_42 = arith.constant dense<0.000000e+00> : vector<2x128xf32>
      %81 = tpu.matmul %arg13, %10, %cst_42 {dimension_numbers = #tpu.dot_dimension_numbers<[1], [0], [0], [1], [0, 0, 1, 1], [], []>} : vector<2x32xf32>, vector<32x128xf32>, vector<2x128xf32> -> vector<2x128xf32>
      %82 = arith.addf %80, %81 : vector<2x128xf32>
      %83 = vector.extract_strided_slice %82 {offsets = [0, 0], sizes = [2, 32], strides = [1, 1]} : vector<2x128xf32> to vector<2x32xf32>
      %84 = arith.negf %83 : vector<2x32xf32>
      %85 = math.exp %84 : vector<2x32xf32>
      %cst_43 = arith.constant 1.000000e+00 : f32
      %86 = vector.broadcast %cst_43 : f32 to vector<2x32xf32>
      %87 = arith.addf %86, %85 : vector<2x32xf32>
      %88 = arith.divf %86, %87 : vector<2x32xf32>
      %89 = vector.extract_strided_slice %82 {offsets = [0, 32], sizes = [2, 32], strides = [1, 1]} : vector<2x128xf32> to vector<2x32xf32>
      %90 = arith.negf %89 : vector<2x32xf32>
      %91 = math.exp %90 : vector<2x32xf32>
      %cst_44 = arith.constant 1.000000e+00 : f32
      %92 = vector.broadcast %cst_44 : f32 to vector<2x32xf32>
      %93 = arith.addf %92, %91 : vector<2x32xf32>
      %94 = arith.divf %92, %93 : vector<2x32xf32>
      %95 = vector.extract_strided_slice %82 {offsets = [0, 64], sizes = [2, 32], strides = [1, 1]} : vector<2x128xf32> to vector<2x32xf32>
      %96 = math.tanh %95 : vector<2x32xf32>
      %97 = vector.extract_strided_slice %82 {offsets = [0, 96], sizes = [2, 32], strides = [1, 1]} : vector<2x128xf32> to vector<2x32xf32>
      %98 = arith.negf %97 : vector<2x32xf32>
      %99 = math.exp %98 : vector<2x32xf32>
      %cst_45 = arith.constant 1.000000e+00 : f32
      %100 = vector.broadcast %cst_45 : f32 to vector<2x32xf32>
      %101 = arith.addf %100, %99 : vector<2x32xf32>
      %102 = arith.divf %100, %101 : vector<2x32xf32>
      %103 = arith.mulf %94, %arg14 : vector<2x32xf32>
      %104 = arith.mulf %88, %96 : vector<2x32xf32>
      %105 = arith.addf %103, %104 : vector<2x32xf32>
      %106 = math.tanh %105 : vector<2x32xf32>
      %107 = arith.mulf %102, %106 : vector<2x32xf32>
      %cst_46 = arith.constant 0.000000e+00 : f32
      %108 = vector.shape_cast %76 : vector<2x1xi1> to vector<2x1xi1>
      %109 = vector.broadcast %108 : vector<2x1xi1> to vector<2x32xi1>
      %110 = vector.broadcast %cst_46 : f32 to vector<2x32xf32>
      %111 = arith.select %109, %107, %110 : vector<2x32xi1>, vector<2x32xf32>
      %112 = arith.index_cast %21 : i32 to index
      %c0_47 = arith.constant 0 : index
      %c32 = arith.constant 32 : index
      %113 = vector.load %arg8[%112, %c0_47, %c32] : memref<8x2x64xf32, #tpu.memory_space<vmem>>, vector<1x2x32xf32>
      %114 = vector.shape_cast %113 : vector<1x2x32xf32> to vector<2x32xf32>
      %115 = vector.shape_cast %111 : vector<2x32xf32> to vector<1x2x32xf32>
      tpu.vector_store %arg8[%112, %c0_47, %c32], %115 {strides = array<i32>} : memref<8x2x64xf32, #tpu.memory_space<vmem>>, vector<1x2x32xf32>,
      %116 = vector.shape_cast %76 : vector<2x1xi1> to vector<2x1xi1>
      %117 = vector.broadcast %116 : vector<2x1xi1> to vector<2x32xi1>
      %118 = arith.select %117, %107, %arg13 : vector<2x32xi1>, vector<2x32xf32>
      %119 = vector.shape_cast %76 : vector<2x1xi1> to vector<2x1xi1>
      %120 = vector.broadcast %119 : vector<2x1xi1> to vector<2x32xi1>
      %121 = arith.select %120, %105, %arg14 : vector<2x32xi1>, vector<2x32xf32>
      scf.yield %68, %71, %118, %121 : vector<2x32xf32>, vector<2x32xf32>, vector<2x32xf32>, vector<2x32xf32>
    }
    %c8_i32_24 = arith.constant 8 : i32
    return
  }
}

module attributes {stable_mosaic.version = 11 : i64} {
  func.func @_label_attn_kernel(%arg0: memref<2x8xf32, #tpu.memory_space<vmem>>, %arg1: memref<8x2x64xf32, #tpu.memory_space<vmem>>, %arg2: memref<8x64xf32, #tpu.memory_space<vmem>>, %arg3: memref<64x32xf32, #tpu.memory_space<vmem>>, %arg4: memref<1x32xf32, #tpu.memory_space<vmem>>, %arg5: memref<32x1xf32, #tpu.memory_space<vmem>>, %arg6: memref<1x1xf32, #tpu.memory_space<vmem>>, %arg7: memref<2x8xf32, #tpu.memory_space<vmem>>) attributes {dimension_semantics = [], scalar_prefetch = 0 : i64, scratch_operands = 0 : i64, tpu.core_type = #tpu.core_type<tc>} {
    %c0 = arith.constant 0 : index
    %c0_0 = arith.constant 0 : index
    %c0_1 = arith.constant 0 : index
    %0 = vector.load %arg1[%c0, %c0_0, %c0_1] : memref<8x2x64xf32, #tpu.memory_space<vmem>>, vector<8x2x64xf32>
    %c0_2 = arith.constant 0 : index
    %c0_3 = arith.constant 0 : index
    %1 = vector.load %arg0[%c0_2, %c0_3] : memref<2x8xf32, #tpu.memory_space<vmem>>, vector<2x8xf32>
    %c0_4 = arith.constant 0 : index
    %c0_5 = arith.constant 0 : index
    %2 = vector.load %arg2[%c0_4, %c0_5] : memref<8x64xf32, #tpu.memory_space<vmem>>, vector<8x64xf32>
    %3 = arith.truncf %2 : vector<8x64xf32> to vector<8x64xbf16>
    %c0_6 = arith.constant 0 : index
    %c0_7 = arith.constant 0 : index
    %4 = vector.load %arg3[%c0_6, %c0_7] : memref<64x32xf32, #tpu.memory_space<vmem>>, vector<64x32xf32>
    %5 = arith.truncf %4 : vector<64x32xf32> to vector<64x32xbf16>
    %c0_8 = arith.constant 0 : index
    %c0_9 = arith.constant 0 : index
    %6 = vector.load %arg5[%c0_8, %c0_9] : memref<32x1xf32, #tpu.memory_space<vmem>>, vector<32x1xf32>
    %7 = arith.truncf %6 : vector<32x1xf32> to vector<32x1xbf16>
    %c0_10 = arith.constant 0 : index
    %c0_11 = arith.constant 0 : index
    %8 = vector.load %arg4[%c0_10, %c0_11] : memref<1x32xf32, #tpu.memory_space<vmem>>, vector<1x32xf32>
    %c0_12 = arith.constant 0 : index
    %c0_13 = arith.constant 0 : index
    %9 = vector.load %arg6[%c0_12, %c0_13] : memref<1x1xf32, #tpu.memory_space<vmem>>, vector<1x1xf32>
    %10 = vector.extract_strided_slice %0 {offsets = [0, 0, 0], sizes = [8, 1, 64], strides = [1, 1, 1]} : vector<8x2x64xf32> to vector<8x1x64xf32>
    %11 = vector.shape_cast %10 : vector<8x1x64xf32> to vector<8x64xf32>
    %12 = arith.truncf %11 : vector<8x64xf32> to vector<8x64xbf16>
    %13 = vector.extract_strided_slice %1 {offsets = [0, 0], sizes = [1, 8], strides = [1, 1]} : vector<2x8xf32> to vector<1x8xf32>
    %cst = arith.constant 0.000000e+00 : f32
    %14 = vector.broadcast %cst : f32 to vector<1x8xf32>
    %15 = arith.cmpf ogt, %13, %14 : vector<1x8xf32>
    %cst_14 = arith.constant 0.000000e+00 : f32
    %cst_15 = arith.constant -1.000000e+09 : f32
    %16 = vector.broadcast %cst_14 : f32 to vector<1x8xf32>
    %17 = vector.broadcast %cst_15 : f32 to vector<1x8xf32>
    %18 = arith.select %15, %16, %17 : vector<1x8xi1>, vector<1x8xf32>
    %cst_16 = arith.constant dense<0.000000e+00> : vector<8x8xf32>
    %19 = tpu.matmul %3, %12, %cst_16 {dimension_numbers = #tpu.dot_dimension_numbers<[1], [1], [0], [0], [0, 0, 1, 0], [], []>} : vector<8x64xbf16>, vector<8x64xbf16>, vector<8x8xf32> -> vector<8x8xf32>
    %20 = vector.broadcast %18 : vector<1x8xf32> to vector<8x8xf32>
    %21 = arith.addf %19, %20 : vector<8x8xf32>
    %cst_17 = arith.constant dense<0xFF800000> : vector<8xf32>
    %22 = vector.multi_reduction <maximumf>, %21, %cst_17 [1] : vector<8x8xf32> to vector<8xf32>
    %23 = vector.shape_cast %22 : vector<8xf32> to vector<8x1xf32>
    %24 = vector.broadcast %23 : vector<8x1xf32> to vector<8x8xf32>
    %25 = arith.subf %21, %24 : vector<8x8xf32>
    %26 = math.exp %25 : vector<8x8xf32>
    %cst_18 = arith.constant dense<0.000000e+00> : vector<8xf32>
    %27 = vector.multi_reduction <add>, %26, %cst_18 [1] : vector<8x8xf32> to vector<8xf32>
    %28 = vector.shape_cast %27 : vector<8xf32> to vector<8x1xf32>
    %29 = tpu.reciprocal %28 {approx = true} : vector<8x1xf32> -> vector<8x1xf32>
    %30 = vector.broadcast %29 : vector<8x1xf32> to vector<8x8xf32>
    %31 = arith.mulf %26, %30 : vector<8x8xf32>
    %32 = arith.truncf %31 : vector<8x8xf32> to vector<8x8xbf16>
    %cst_19 = arith.constant dense<0.000000e+00> : vector<8x64xf32>
    %33 = tpu.matmul %32, %12, %cst_19 {dimension_numbers = #tpu.dot_dimension_numbers<[1], [0], [0], [1], [0, 0, 1, 1], [], []>} : vector<8x8xbf16>, vector<8x64xbf16>, vector<8x64xf32> -> vector<8x64xf32>
    %34 = vector.extract_strided_slice %0 {offsets = [0, 1, 0], sizes = [8, 1, 64], strides = [1, 1, 1]} : vector<8x2x64xf32> to vector<8x1x64xf32>
    %35 = vector.shape_cast %34 : vector<8x1x64xf32> to vector<8x64xf32>
    %36 = arith.truncf %35 : vector<8x64xf32> to vector<8x64xbf16>
    %37 = vector.extract_strided_slice %1 {offsets = [1, 0], sizes = [1, 8], strides = [1, 1]} : vector<2x8xf32> to vector<1x8xf32>
    %cst_20 = arith.constant 0.000000e+00 : f32
    %38 = vector.broadcast %cst_20 : f32 to vector<1x8xf32>
    %39 = arith.cmpf ogt, %37, %38 : vector<1x8xf32>
    %cst_21 = arith.constant 0.000000e+00 : f32
    %cst_22 = arith.constant -1.000000e+09 : f32
    %40 = vector.broadcast %cst_21 : f32 to vector<1x8xf32>
    %41 = vector.broadcast %cst_22 : f32 to vector<1x8xf32>
    %42 = arith.select %39, %40, %41 : vector<1x8xi1>, vector<1x8xf32>
    %cst_23 = arith.constant dense<0.000000e+00> : vector<8x8xf32>
    %43 = tpu.matmul %3, %36, %cst_23 {dimension_numbers = #tpu.dot_dimension_numbers<[1], [1], [0], [0], [0, 0, 1, 0], [], []>} : vector<8x64xbf16>, vector<8x64xbf16>, vector<8x8xf32> -> vector<8x8xf32>
    %44 = vector.broadcast %42 : vector<1x8xf32> to vector<8x8xf32>
    %45 = arith.addf %43, %44 : vector<8x8xf32>
    %cst_24 = arith.constant dense<0xFF800000> : vector<8xf32>
    %46 = vector.multi_reduction <maximumf>, %45, %cst_24 [1] : vector<8x8xf32> to vector<8xf32>
    %47 = vector.shape_cast %46 : vector<8xf32> to vector<8x1xf32>
    %48 = vector.broadcast %47 : vector<8x1xf32> to vector<8x8xf32>
    %49 = arith.subf %45, %48 : vector<8x8xf32>
    %50 = math.exp %49 : vector<8x8xf32>
    %cst_25 = arith.constant dense<0.000000e+00> : vector<8xf32>
    %51 = vector.multi_reduction <add>, %50, %cst_25 [1] : vector<8x8xf32> to vector<8xf32>
    %52 = vector.shape_cast %51 : vector<8xf32> to vector<8x1xf32>
    %53 = tpu.reciprocal %52 {approx = true} : vector<8x1xf32> -> vector<8x1xf32>
    %54 = vector.broadcast %53 : vector<8x1xf32> to vector<8x8xf32>
    %55 = arith.mulf %50, %54 : vector<8x8xf32>
    %56 = arith.truncf %55 : vector<8x8xf32> to vector<8x8xbf16>
    %cst_26 = arith.constant dense<0.000000e+00> : vector<8x64xf32>
    %57 = tpu.matmul %56, %36, %cst_26 {dimension_numbers = #tpu.dot_dimension_numbers<[1], [0], [0], [1], [0, 0, 1, 1], [], []>} : vector<8x8xbf16>, vector<8x64xbf16>, vector<8x64xf32> -> vector<8x64xf32>
    %58 = tpu.concatenate %33, %57 in 0 : vector<8x64xf32>, vector<8x64xf32> -> vector<16x64xf32>
    %59 = arith.truncf %58 : vector<16x64xf32> to vector<16x64xbf16>
    %cst_27 = arith.constant dense<0.000000e+00> : vector<16x32xf32>
    %60 = tpu.matmul %59, %5, %cst_27 {dimension_numbers = #tpu.dot_dimension_numbers<[1], [0], [0], [1], [0, 0, 1, 1], [], []>} : vector<16x64xbf16>, vector<64x32xbf16>, vector<16x32xf32> -> vector<16x32xf32>
    %61 = vector.broadcast %8 : vector<1x32xf32> to vector<16x32xf32>
    %62 = arith.addf %60, %61 : vector<16x32xf32>
    %cst_28 = arith.constant 0.000000e+00 : f32
    %63 = vector.broadcast %cst_28 : f32 to vector<16x32xf32>
    %64 = arith.maximumf %62, %63 : vector<16x32xf32>
    %65 = vector.extract_strided_slice %64 {offsets = [0, 0], sizes = [8, 32], strides = [1, 1]} : vector<16x32xf32> to vector<8x32xf32>
    %66 = arith.truncf %65 : vector<8x32xf32> to vector<8x32xbf16>
    %cst_29 = arith.constant dense<0.000000e+00> : vector<8x1xf32>
    %67 = tpu.matmul %66, %7, %cst_29 {dimension_numbers = #tpu.dot_dimension_numbers<[1], [0], [0], [1], [0, 0, 1, 1], [], []>} : vector<8x32xbf16>, vector<32x1xbf16>, vector<8x1xf32> -> vector<8x1xf32>
    %68 = vector.broadcast %9 : vector<1x1xf32> to vector<8x1xf32>
    %69 = arith.addf %67, %68 : vector<8x1xf32>
    %70 = tpu.transpose %69, [1, 0] : vector<8x1xf32> -> vector<1x8xf32>
    %71 = vector.extract_strided_slice %64 {offsets = [8, 0], sizes = [8, 32], strides = [1, 1]} : vector<16x32xf32> to vector<8x32xf32>
    %72 = arith.truncf %71 : vector<8x32xf32> to vector<8x32xbf16>
    %cst_30 = arith.constant dense<0.000000e+00> : vector<8x1xf32>
    %73 = tpu.matmul %72, %7, %cst_30 {dimension_numbers = #tpu.dot_dimension_numbers<[1], [0], [0], [1], [0, 0, 1, 1], [], []>} : vector<8x32xbf16>, vector<32x1xbf16>, vector<8x1xf32> -> vector<8x1xf32>
    %74 = vector.broadcast %9 : vector<1x1xf32> to vector<8x1xf32>
    %75 = arith.addf %73, %74 : vector<8x1xf32>
    %76 = tpu.transpose %75, [1, 0] : vector<8x1xf32> -> vector<1x8xf32>
    %77 = tpu.concatenate %70, %76 in 0 : vector<1x8xf32>, vector<1x8xf32> -> vector<2x8xf32>
    %c0_31 = arith.constant 0 : index
    %c0_32 = arith.constant 0 : index
    %78 = vector.load %arg7[%c0_31, %c0_32] : memref<2x8xf32, #tpu.memory_space<vmem>>, vector<2x8xf32>
    tpu.vector_store %arg7[%c0_31, %c0_32], %77 {strides = array<i32>} : memref<2x8xf32, #tpu.memory_space<vmem>>, vector<2x8xf32>,
    return
  }
}

</mosaic_0001>

<llo_original>
// kernel: lstm_classifier_forward.4
$region0: #{lstm_classifier_forward.4}
  #allocation0 [shape = 'u32[]', space=smem, size = 0x4, offset = 0x4, fixed_abs, tag = 'smem constant byte address 0x4 - core index']
  #allocation1 [shape = 'u32[144,128]{1,0:T(1,128)}', space=vmem, size = 0x12000, scoped, tag = 'internal scratch']
  #allocation2 [shape = 'f32[8,2,256]{2,1,0:T(2,128)}', space=vmem, size = 0x4000, scoped, tag = 'scratch operand']
  %s0 = inlined_call_operand.vmem [shape: f32[8,2,1], index: 0, kind: input, shape index: {}]
  %s1 = inlined_call_operand.vmem [shape: bf16[8,2,64], index: 1, kind: input, shape index: {}]
  %s2 = inlined_call_operand.vmem [shape: bf16[64,256], index: 2, kind: input, shape index: {}]
  %s3 = inlined_call_operand.vmem [shape: f32[32,128], index: 3, kind: input, shape index: {}]
  %s4 = inlined_call_operand.vmem [shape: f32[32,128], index: 4, kind: input, shape index: {}]
  %s5 = inlined_call_operand.vmem [shape: f32[1,256], index: 5, kind: input, shape index: {}]
  %s6 = inlined_call_operand.vmem [shape: f32[2,2,32], index: 6, kind: input, shape index: {}]
  %s7 = inlined_call_operand.vmem [shape: f32[2,2,32], index: 7, kind: input, shape index: {}]
  %s8 = inlined_call_operand.vmem [shape: f32[8,2,64], index: 8, kind: output, shape index: {}]
  %s9 = sld [smem:[#allocation0]]
  $region49: #{lstm_classifier_forward.4} parent=0
    _
  %s11 = ssub.s32 1, %s9
  %s12 = scalar_select 0, %s11, %s9
  // Predicated region
  $region2: #{lstm_classifier_forward.4} parent=0 // pred_check
    _
  $region3: #{lstm_classifier_forward.4} parent=0 // pred_check_branch
    %14 = sbr.rel (0) target = $region5
  $region4: #{lstm_classifier_forward.4} parent=0 // pred_region
    _
  $region5: #{lstm_classifier_forward.4} parent=0 // pred_fallthru
    _
  // Predicated region
  $region6: #{lstm_classifier_forward.4} parent=0 // pred_check
    _
  $region7: #{lstm_classifier_forward.4} parent=0 // pred_check_branch
    %16 = sbr.rel (0) target = $region9
  $region8: #{lstm_classifier_forward.4} parent=0 // pred_region
    _
  $region9: #{lstm_classifier_forward.4} parent=0 // pred_fallthru
    _
  // Predicated region
  $region10: #{lstm_classifier_forward.4} parent=0 // pred_check
    _
  $region11: #{lstm_classifier_forward.4} parent=0 // pred_check_branch
    %18 = sbr.rel (0) target = $region13
  $region12: #{lstm_classifier_forward.4} parent=0 // pred_region
    _
  $region13: #{lstm_classifier_forward.4} parent=0 // pred_fallthru
    _
  // Predicated region
  $region14: #{lstm_classifier_forward.4} parent=0 // pred_check
    _
  $region15: #{lstm_classifier_forward.4} parent=0 // pred_check_branch
    %20 = sbr.rel (0) target = $region17
  $region16: #{lstm_classifier_forward.4} parent=0 // pred_region
    _
  $region17: #{lstm_classifier_forward.4} parent=0 // pred_fallthru
    _
  // Predicated region
  $region18: #{lstm_classifier_forward.4} parent=0 // pred_check
    _
  $region19: #{lstm_classifier_forward.4} parent=0 // pred_check_branch
    %22 = sbr.rel (0) target = $region21
  $region20: #{lstm_classifier_forward.4} parent=0 // pred_region
    _
  $region21: #{lstm_classifier_forward.4} parent=0 // pred_fallthru
    _
  // Predicated region
  $region22: #{lstm_classifier_forward.4} parent=0 // pred_check
    _
  $region23: #{lstm_classifier_forward.4} parent=0 // pred_check_branch
    %24 = sbr.rel (0) target = $region25
  $region24: #{lstm_classifier_forward.4} parent=0 // pred_region
    _
  $region25: #{lstm_classifier_forward.4} parent=0 // pred_fallthru
    _
  // Predicated region
  $region26: #{lstm_classifier_forward.4} parent=0 // pred_check
    _
  $region27: #{lstm_classifier_forward.4} parent=0 // pred_check_branch
    %26 = sbr.rel (0) target = $region29
  $region28: #{lstm_classifier_forward.4} parent=0 // pred_region
    _
  $region29: #{lstm_classifier_forward.4} parent=0 // pred_fallthru
    _
  // Predicated region
  $region30: #{lstm_classifier_forward.4} parent=0 // pred_check
    _
  $region31: #{lstm_classifier_forward.4} parent=0 // pred_check_branch
    %28 = sbr.rel (0) target = $region33
  $region32: #{lstm_classifier_forward.4} parent=0 // pred_region
    _
  $region33: #{lstm_classifier_forward.4} parent=0 // pred_fallthru
    _
  %v30 = vld [vmem:[%s1] sm:$0x1]
  %v31 = vld [vmem:[%s1 + $0x1] sm:$0x1]
  %v32 = vld [vmem:[%s1 + $0x2] sm:$0x1]
  %v33 = vld [vmem:[%s1 + $0x3] sm:$0x1]
  %v34 = vld [vmem:[%s1 + $0x4] sm:$0x1]
  %v35 = vld [vmem:[%s1 + $0x5] sm:$0x1]
  %v36 = vld [vmem:[%s1 + $0x6] sm:$0x1]
  %v37 = vld [vmem:[%s1 + $0x7] sm:$0x1]
  %v38 = vld [vmem:[%s2] sm:$0xff]
  %v39 = vld [vmem:[%s2 + $0x8] sm:$0xff]
  %v40 = vld [vmem:[%s2 + $0x10] sm:$0xff]
  %v41 = vld [vmem:[%s2 + $0x18] sm:$0xff]
  %v42 = vld [vmem:[%s2 + $0x20] sm:$0xff]
  %v43 = vld [vmem:[%s2 + $0x28] sm:$0xff]
  %v44 = vld [vmem:[%s2 + $0x30] sm:$0xff]
  %v45 = vld [vmem:[%s2 + $0x38] sm:$0xff]
  %v46 = vld [vmem:[%s5] sm:$0x3]
  %v48 = vlaneseq
  %v49 = vshrl.u32 %v48, 7
  %v50 = vsub.s32 0, %v49
  %v51 = vrot.slane %v46, %v50
  %v52 = vlaneseq
  %v53 = vshrl.u32 %v52, 7
  %v54 = vsub.s32 1, %v53
  %v55 = vrot.slane %v46, %v54
  %v66 = vcombine.low %v30, %v31
  %v67 = vcombine.low %v32, %v33
  %v68 = vcombine.low %v34, %v35
  %v69 = vcombine.low %v36, %v37
  %v71 = vunpack.c.l.s4 1966171168
  %v72 = vunpack.c.0.s8 %v71
  %v73 = vlaneseq
  %v74 = vshrl.u32 %v73, 7
  %v75 = vsub.s32 %v72, %v74
  %v76 = vrot.slane %v66, %v75
  %v78 = vunpack.c.l.s4 1966171168
  %v79 = vunpack.c.0.s8 %v78
  %v80 = vlaneseq
  %v81 = vshrl.u32 %v80, 7
  %v82 = vsub.s32 %v79, %v81
  %v83 = vrot.slane %v67, %v82
  %v85 = vunpack.c.l.s4 1966171168
  %v86 = vunpack.c.0.s8 %v85
  %v87 = vlaneseq
  %v88 = vshrl.u32 %v87, 7
  %v89 = vsub.s32 %v86, %v88
  %v90 = vrot.slane %v68, %v89
  %v92 = vunpack.c.l.s4 1966171168
  %v93 = vunpack.c.0.s8 %v92
  %v94 = vlaneseq
  %v95 = vshrl.u32 %v94, 7
  %v96 = vsub.s32 %v93, %v95
  %v97 = vrot.slane %v69, %v96
  %v98 = vcombine.low %v76, %v83
  %v99 = vcombine.low %v90, %v97
  %v101 = vunpack.c.l.s4 1966171168
  %v102 = vunpack.c.0.s8 %v101
  %v103 = vlaneseq
  %v104 = vshrl.u32 %v103, 7
  %v105 = vsub.s32 %v102, %v104
  %v106 = vrot.slane %v98, %v105
  %v108 = vunpack.c.l.s4 1966171168
  %v109 = vunpack.c.0.s8 %v108
  %v110 = vlaneseq
  %v111 = vshrl.u32 %v110, 7
  %v112 = vsub.s32 %v109, %v111
  %v113 = vrot.slane %v99, %v112
  %v114 = vcombine.low %v106, %v113
  %v123 = vunpack.c.l.b16 %v38
  %v124 = vunpack.c.h.b16 %v38
  %v125 = vunpack.c.l.b16 %v39
  %v126 = vunpack.c.h.b16 %v39
  %v127 = vunpack.c.l.b16 %v40
  %v128 = vunpack.c.h.b16 %v40
  %v129 = vunpack.c.l.b16 %v41
  %v130 = vunpack.c.h.b16 %v41
  %v131 = vunpack.c.l.b16 %v42
  %v132 = vunpack.c.h.b16 %v42
  %v133 = vunpack.c.l.b16 %v43
  %v134 = vunpack.c.h.b16 %v43
  %v135 = vunpack.c.l.b16 %v44
  %v136 = vunpack.c.h.b16 %v44
  %v137 = vunpack.c.l.b16 %v45
  %v138 = vunpack.c.h.b16 %v45
  %v139 = vpack.c.b16 %v125, %v123
  %v140 = vpack.c.b16 %v126, %v124
  %v141 = vpack.c.b16 %v129, %v127
  %v142 = vpack.c.b16 %v130, %v128
  %v143 = vpack.c.b16 %v133, %v131
  %v144 = vpack.c.b16 %v134, %v132
  %v145 = vpack.c.b16 %v137, %v135
  %v146 = vpack.c.b16 %v138, %v136
  %vm155 = vcmask 523264
  %v157 = vsel %vm155, %v114, 0
  %159 = vmatprep.subr.bf16.mxu0 %v140
  %160 = vmatpush1.bf16.msra.mxu0 %v139
  %161 = vmatprep.subr.bf16.mxu0 %v142
  %162 = vmatpush1.bf16.msra.mxu0 %v141
  %163 = vmatprep.subr.bf16.mxu0 %v144
  %164 = vmatpush1.bf16.msra.mxu0 %v143
  %165 = vmatprep.subr.bf16.mxu0 %v146
  %166 = vmatpush1.bf16.msra.mxu0 %v145
  %167 = vmatprep.subr.bf16.mxu0 0
  %168 = vmatpush1.bf16.msra.mxu0 0
  %169 = vmatprep.subr.bf16.mxu0 0
  %170 = vmatpush1.bf16.msra.mxu0 0
  %171 = vmatprep.subr.bf16.mxu0 0
  %172 = vmatpush1.bf16.msra.mxu0 0
  %173 = vmatprep.subr.bf16.mxu0 0
  %174 = vmatpush1.bf16.msra.mxu0 0
  %175 = vmatprep.subr.bf16.mxu0 0
  %176 = vmatpush1.bf16.msra.mxu0 0
  %177 = vmatprep.subr.bf16.mxu0 0
  %178 = vmatpush1.bf16.msra.mxu0 0
  %179 = vmatprep.subr.bf16.mxu0 0
  %180 = vmatpush1.bf16.msra.mxu0 0
  %181 = vmatprep.subr.bf16.mxu0 0
  %182 = vmatpush1.bf16.msra.mxu0 0
  %183 = vmatprep.subr.bf16.mxu0 0
  %184 = vmatpush1.bf16.msra.mxu0 0
  %185 = vmatprep.subr.bf16.mxu0 0
  %186 = vmatpush1.bf16.msra.mxu0 0
  %187 = vmatprep.subr.bf16.mxu0 0
  %188 = vmatpush1.bf16.msra.mxu0 0
  %189 = vmatprep.subr.bf16.mxu0 0
  %190 = vmatpush1.bf16.msra.mxu0 0
  %191 = vmatprep.mubr.bf16.mxu0 0
  %192 = vmatmul.mubr.bf16.gmra.mrb[0].mxu0 %v157
  %v193 = vpop.f32.mrb[0].mxu0
  %v194 = vadd.f32 %v51, %v193
  %v195 = vpop.f32.mrb[0].mxu0
  %v196 = vadd.f32 %v55, %v195
  %v197 = vpop.f32.mrb[0].mxu0
  %v198 = vadd.f32 %v51, %v197
  %v199 = vpop.f32.mrb[0].mxu0
  %v200 = vadd.f32 %v55, %v199
  %201 = vdwg.mxu0
  %v206 = vcombine.low %v194, %v196
  %v207 = vcombine.high %v194, %v196
  %v209 = vunpack.c.l.s4 1983009808
  %v210 = vunpack.c.0.s8 %v209
  %v211 = vlaneseq
  %v212 = vshrl.u32 %v211, 7
  %v213 = vsub.s32 %v210, %v212
  %v214 = vrot.slane %v206, %v213
  %v216 = vunpack.c.l.s4 1983009808
  %v217 = vunpack.c.0.s8 %v216
  %v218 = vlaneseq
  %v219 = vshrl.u32 %v218, 7
  %v220 = vsub.s32 %v217, %v219
  %v221 = vrot.slane %v207, %v220
  %v222 = vcombine.high %v214, %v214
  %v223 = vcombine.high %v221, %v221
  %v224 = vcombine.low %v198, %v200
  %v225 = vcombine.high %v198, %v200
  %v227 = vunpack.c.l.s4 1983009808
  %v228 = vunpack.c.0.s8 %v227
  %v229 = vlaneseq
  %v230 = vshrl.u32 %v229, 7
  %v231 = vsub.s32 %v228, %v230
  %v232 = vrot.slane %v224, %v231
  %v234 = vunpack.c.l.s4 1983009808
  %v235 = vunpack.c.0.s8 %v234
  %v236 = vlaneseq
  %v237 = vshrl.u32 %v236, 7
  %v238 = vsub.s32 %v235, %v237
  %v239 = vrot.slane %v225, %v238
  %v240 = vcombine.high %v232, %v232
  %v241 = vcombine.high %v239, %v239
  %250 = vst [vmem:[#allocation2] sm:$0xf] %v214
  %251 = vst [vmem:[#allocation2 + $0x4] sm:$0xf] %v222
  %252 = vst [vmem:[#allocation2 + $0x8] sm:$0xf] %v221
  %253 = vst [vmem:[#allocation2 + $0xc] sm:$0xf] %v223
  %254 = vst [vmem:[#allocation2 + $0x10] sm:$0xf] %v232
  %255 = vst [vmem:[#allocation2 + $0x14] sm:$0xf] %v240
  %256 = vst [vmem:[#allocation2 + $0x18] sm:$0xf] %v239
  %257 = vst [vmem:[#allocation2 + $0x1c] sm:$0xf] %v241
  %v258 = vld [vmem:[%s3] sm:$0xff]
  %v259 = vld [vmem:[%s3 + $0x8] sm:$0xff]
  %v260 = vld [vmem:[%s3 + $0x10] sm:$0xff]
  %v261 = vld [vmem:[%s3 + $0x18] sm:$0xff]
  %v262 = vld [vmem:[%s4] sm:$0xff]
  %v263 = vld [vmem:[%s4 + $0x8] sm:$0xff]
  %v264 = vld [vmem:[%s4 + $0x10] sm:$0xff]
  %v265 = vld [vmem:[%s4 + $0x18] sm:$0xff]
  %v266 = vld [vmem:[%s6] sm:$0x3]
  %v267 = vld [vmem:[%s7] sm:$0x3]
  %s268 = scalar_lea.vmem %s6, 2
  %v269 = vld [vmem:[%s268] sm:$0x3]
  %s270 = scalar_lea.vmem %s7, 2
  %v271 = vld [vmem:[%s270] sm:$0x3]
  loop: start=0, step=1, limit=8
  $region34: #{lstm_classifier_forward.4} parent=0 // loop_pre_header
    _
  $region35: #{lstm_classifier_forward.4} parent=0 // loop_header
    %s273 = sphi 0, %s277
    %p274 = scmp.ge.s32.totalorder %s273, 8
    %v278 = vphi %v266, %v420
    %v279 = vphi %v267, %v432
    %v280 = vphi %v269, %v576
    %v281 = vphi %v271, %v588
  $region36: #{lstm_classifier_forward.4} parent=0 // loop_header_branch
    %276 = sbr.rel (%p274) target = $region40
  $region37: #{lstm_classifier_forward.4} parent=0 // loop_body
    %s282 = ssub.s32 7, %s273
    %s283 = smul.u32 %s273, 2
    %s284 = scalar_lea.vmem %s0, %s283
    %v285 = vld [vmem:[%s284] sm:$0x3]
    %vm286 = vcmp.gt.f32.partialorder %v285, 0.0
    %s287 = smul.addr %s283, 2
    %s288 = scalar_lea.vmem [#allocation2], %s287
    %v289 = vld [vmem:[%s288] sm:$0xf]
    %vm290 = vcmask 261120
    %v292 = vsel %vm290, %v278, 0
    %294 = vmatprep.subr.mxu0 0.0
    %295 = vmatpush1.msra.mxu0 %v258
    %296 = vmatprep.subr.mxu0 0.0
    %297 = vmatpush1.msra.mxu0 %v259
    %298 = vmatprep.subr.mxu0 0.0
    %299 = vmatpush1.msra.mxu0 %v260
    %300 = vmatprep.subr.mxu0 0.0
    %301 = vmatpush1.msra.mxu0 %v261
    %302 = vmatprep.subr.mxu0 0.0
    %303 = vmatpush1.msra.mxu0 0.0
    %304 = vmatprep.subr.mxu0 0.0
    %305 = vmatpush1.msra.mxu0 0.0
    %306 = vmatprep.subr.mxu0 0.0
    %307 = vmatpush1.msra.mxu0 0.0
    %308 = vmatprep.subr.mxu0 0.0
    %309 = vmatpush1.msra.mxu0 0.0
    %310 = vmatprep.subr.mxu0 0.0
    %311 = vmatpush1.msra.mxu0 0.0
    %312 = vmatprep.subr.mxu0 0.0
    %313 = vmatpush1.msra.mxu0 0.0
    %314 = vmatprep.subr.mxu0 0.0
    %315 = vmatpush1.msra.mxu0 0.0
    %316 = vmatprep.subr.mxu0 0.0
    %317 = vmatpush1.msra.mxu0 0.0
    %318 = vmatprep.subr.mxu0 0.0
    %319 = vmatpush1.msra.mxu0 0.0
    %320 = vmatprep.subr.mxu0 0.0
    %321 = vmatpush1.msra.mxu0 0.0
    %322 = vmatprep.subr.mxu0 0.0
    %323 = vmatpush1.msra.mxu0 0.0
    %324 = vmatprep.subr.mxu0 0.0
    %325 = vmatpush1.msra.mxu0 0.0
    %326 = vmatprep.subr.mxu0 0.0
    %327 = vmatpush1.msra.mxu0 0.0
    %328 = vmatprep.subr.mxu0 0.0
    %329 = vmatpush1.msra.mxu0 0.0
    %330 = vmatprep.subr.mxu0 0.0
    %331 = vmatpush1.msra.mxu0 0.0
    %332 = vmatprep.subr.mxu0 0.0
    %333 = vmatpush1.msra.mxu0 0.0
    %334 = vmatprep.subr.mxu0 0.0
    %335 = vmatpush1.msra.mxu0 0.0
    %336 = vmatprep.subr.mxu0 0.0
    %337 = vmatpush1.msra.mxu0 0.0
    %338 = vmatprep.subr.mxu0 0.0
    %339 = vmatpush1.msra.mxu0 0.0
    %340 = vmatprep.subr.mxu0 0.0
    %341 = vmatpush1.msra.mxu0 0.0
    %342 = vmatprep.subr.mxu0 0.0
    %343 = vmatpush1.msra.mxu0 0.0
    %344 = vmatprep.subr.mxu0 0.0
    %345 = vmatpush1.msra.mxu0 0.0
    %346 = vmatprep.subr.mxu0 0.0
    %347 = vmatpush1.msra.mxu0 0.0
    %348 = vmatprep.subr.mxu0 0.0
    %349 = vmatpush1.msra.mxu0 0.0
    %350 = vmatprep.subr.mxu0 0.0
    %351 = vmatpush1.msra.mxu0 0.0
    %352 = vmatprep.subr.mxu0 0.0
    %353 = vmatpush1.msra.mxu0 0.0
    %354 = vmatprep.subr.mxu0 0.0
    %355 = vmatpush1.msra.mxu0 0.0
    %356 = vmatprep.subr.mxu0 0.0
    %357 = vmatpush1.msra.mxu0 0.0
    %358 = vmatprep.mubr.f32.mxu0 0.0
    %359 = vmatmul.mubr.f32.gmra.mrb[0].mxu0 %v292
    %v360 = vpop.f32.mrb[0].mxu0
    %v361 = vadd.f32 0.0, %v360
    %v362 = vpop.f32.mrb[0].mxu0
    %363 = vdwg.mxu0
    %v364 = vadd.f32 %v289, %v361
    %v365 = vxor.u32 %v364, 2147483648
    %v366 = vmul.f32 %v365, 1.442695
    %v367 = vpow.pop %v366
    %v368 = vadd.f32 %v367, 1.0
    %v369 = vrcp.pop %v368
    %v370 = vmul.f32 1.0, %v369
    %v371 = vtanh.pop %v364
    %v374 = vunpack.c.l.s4 1983009808
    %v375 = vunpack.c.0.s8 %v374
    %v376 = vlaneseq
    %v377 = vshrl.u32 %v376, 7
    %v378 = vsub.s32 %v375, %v377
    %v379 = vrot.slane %v279, %v378
    %380 = vrot.lane.b32.xlu0 %v379, 32
    %v381 = vpop.permute.xlu0 %380
    %v383 = vmul.f32 %v370, %v381
    %385 = vrot.lane.b32.xlu0 %v371, 64
    %v386 = vpop.permute.xlu0 %385
    %v388 = vmul.f32 %v370, %v386
    %390 = vrot.lane.b32.xlu0 %v388, 32
    %v391 = vpop.permute.xlu0 %390
    %v393 = vadd.f32 %v383, %v391
    %v394 = vtanh.pop %v393
    %396 = vrot.lane.b32.xlu0 %v394, 64
    %v397 = vpop.permute.xlu0 %396
    %v399 = vmul.f32 %v370, %v397
    %v400 = vsel %vm286, 1, 0
    %401 = vset.pattern.permute.xlu0 0
    %402 = vperm.xlu0 %401, %v400
    %v403 = vpop.permute.xlu0 %402
    %vm404 = vcmp.eq.s32.totalorder %v403, 1
    %v407 = vunpack.c.l.s4 1983009808
    %v408 = vunpack.c.0.s8 %v407
    %v409 = vlaneseq
    %v410 = vshrl.u32 %v409, 7
    %v411 = vsub.s32 %v408, %v410
    %v412 = vrot.slane %v399, %v411
    %413 = vrot.lane.b32.xlu0 %v412, 32
    %v414 = vpop.permute.xlu0 %413
    %v416 = vsel %vm404, %v414, 0.0
    %s417 = scalar_lea.vmem %s8, %s283
    %vm418 = vcmask 254976
    %419 = vst.msk [vmem:[%s417] sm:$0x3] %vm418, %v416
    %v420 = vsel %vm404, %v414, %v278
    %v423 = vunpack.c.l.s4 1983009808
    %v424 = vunpack.c.0.s8 %v423
    %v425 = vlaneseq
    %v426 = vshrl.u32 %v425, 7
    %v427 = vsub.s32 %v424, %v426
    %v428 = vrot.slane %v393, %v427
    %429 = vrot.lane.b32.xlu0 %v428, 96
    %v430 = vpop.permute.xlu0 %429
    %v432 = vsel %vm404, %v430, %v279
    %s433 = smul.u32 %s282, 2
    %s434 = scalar_lea.vmem %s0, %s433
    %v435 = vld [vmem:[%s434] sm:$0x3]
    %vm436 = vcmp.gt.f32.partialorder %v435, 0.0
    %s437 = smul.addr %s433, 2
    %s438 = scalar_lea.vmem [#allocation2], %s437
    %v439 = vld [vmem:[%s438] sm:$0xf]
    %v441 = vsel %vm290, %v280, 0
    %443 = vmatprep.subr.mxu0 0.0
    %444 = vmatpush1.msra.mxu0 %v262
    %445 = vmatprep.subr.mxu0 0.0
    %446 = vmatpush1.msra.mxu0 %v263
    %447 = vmatprep.subr.mxu0 0.0
    %448 = vmatpush1.msra.mxu0 %v264
    %449 = vmatprep.subr.mxu0 0.0
    %450 = vmatpush1.msra.mxu0 %v265
    %451 = vmatprep.subr.mxu0 0.0
    %452 = vmatpush1.msra.mxu0 0.0
    %453 = vmatprep.subr.mxu0 0.0
    %454 = vmatpush1.msra.mxu0 0.0
    %455 = vmatprep.subr.mxu0 0.0
    %456 = vmatpush1.msra.mxu0 0.0
    %457 = vmatprep.subr.mxu0 0.0
    %458 = vmatpush1.msra.mxu0 0.0
    %459 = vmatprep.subr.mxu0 0.0
    %460 = vmatpush1.msra.mxu0 0.0
    %461 = vmatprep.subr.mxu0 0.0
    %462 = vmatpush1.msra.mxu0 0.0
    %463 = vmatprep.subr.mxu0 0.0
    %464 = vmatpush1.msra.mxu0 0.0
    %465 = vmatprep.subr.mxu0 0.0
    %466 = vmatpush1.msra.mxu0 0.0
    %467 = vmatprep.subr.mxu0 0.0
    %468 = vmatpush1.msra.mxu0 0.0
    %469 = vmatprep.subr.mxu0 0.0
    %470 = vmatpush1.msra.mxu0 0.0
    %471 = vmatprep.subr.mxu0 0.0
    %472 = vmatpush1.msra.mxu0 0.0
    %473 = vmatprep.subr.mxu0 0.0
    %474 = vmatpush1.msra.mxu0 0.0
    %475 = vmatprep.subr.mxu0 0.0
    %476 = vmatpush1.msra.mxu0 0.0
    %477 = vmatprep.subr.mxu0 0.0
    %478 = vmatpush1.msra.mxu0 0.0
    %479 = vmatprep.subr.mxu0 0.0
    %480 = vmatpush1.msra.mxu0 0.0
    %481 = vmatprep.subr.mxu0 0.0
    %482 = vmatpush1.msra.mxu0 0.0
    %483 = vmatprep.subr.mxu0 0.0
    %484 = vmatpush1.msra.mxu0 0.0
    %485 = vmatprep.subr.mxu0 0.0
    %486 = vmatpush1.msra.mxu0 0.0
    %487 = vmatprep.subr.mxu0 0.0
    %488 = vmatpush1.msra.mxu0 0.0
    %489 = vmatprep.subr.mxu0 0.0
    %490 = vmatpush1.msra.mxu0 0.0
    %491 = vmatprep.subr.mxu0 0.0
    %492 = vmatpush1.msra.mxu0 0.0
    %493 = vmatprep.subr.mxu0 0.0
    %494 = vmatpush1.msra.mxu0 0.0
    %495 = vmatprep.subr.mxu0 0.0
    %496 = vmatpush1.msra.mxu0 0.0
    %497 = vmatprep.subr.mxu0 0.0
    %498 = vmatpush1.msra.mxu0 0.0
    %499 = vmatprep.subr.mxu0 0.0
    %500 = vmatpush1.msra.mxu0 0.0
    %501 = vmatprep.subr.mxu0 0.0
    %502 = vmatpush1.msra.mxu0 0.0
    %503 = vmatprep.subr.mxu0 0.0
    %504 = vmatpush1.msra.mxu0 0.0
    %505 = vmatprep.subr.mxu0 0.0
    %506 = vmatpush1.msra.mxu0 0.0
    %507 = vmatprep.mubr.f32.mxu0 0.0
    %508 = vmatmul.mubr.f32.gmra.mrb[0].mxu0 %v441
    %v509 = vpop.f32.mrb[0].mxu0
    %v510 = vadd.f32 0.0, %v509
    %v511 = vpop.f32.mrb[0].mxu0
    %512 = vdwg.mxu0
    %v514 = vrot.slane %v439, 2
    %v516 = vadd.f32 %v514, %v510
    %v517 = vxor.u32 %v516, 2147483648
    %v518 = vmul.f32 %v517, 1.442695
    %v519 = vpow.pop %v518
    %v520 = vadd.f32 %v519, 1.0
    %v521 = vrcp.pop %v520
    %v522 = vmul.f32 1.0, %v521
    %v523 = vtanh.pop %v516
    %v526 = vunpack.c.l.s4 1983009808
    %v527 = vunpack.c.0.s8 %v526
    %v528 = vlaneseq
    %v529 = vshrl.u32 %v528, 7
    %v530 = vsub.s32 %v527, %v529
    %v531 = vrot.slane %v281, %v530
    %532 = vrot.lane.b32.xlu0 %v531, 32
    %v533 = vpop.permute.xlu0 %532
    %v535 = vmul.f32 %v522, %v533
    %537 = vrot.lane.b32.xlu0 %v523, 64
    %v538 = vpop.permute.xlu0 %537
    %v540 = vmul.f32 %v522, %v538
    %542 = vrot.lane.b32.xlu0 %v540, 32
    %v543 = vpop.permute.xlu0 %542
    %v545 = vadd.f32 %v535, %v543
    %v546 = vtanh.pop %v545
    %548 = vrot.lane.b32.xlu0 %v546, 64
    %v549 = vpop.permute.xlu0 %548
    %v551 = vmul.f32 %v522, %v549
    %v552 = vsel %vm436, 1, 0
    %553 = vset.pattern.permute.xlu0 0
    %554 = vperm.xlu0 %553, %v552
    %v555 = vpop.permute.xlu0 %554
    %vm556 = vcmp.eq.s32.totalorder %v555, 1
    %v559 = vunpack.c.l.s4 1983009808
    %v560 = vunpack.c.0.s8 %v559
    %v561 = vlaneseq
    %v562 = vshrl.u32 %v561, 7
    %v563 = vsub.s32 %v560, %v562
    %v564 = vrot.slane %v551, %v563
    %565 = vrot.lane.b32.xlu0 %v564, 32
    %v566 = vpop.permute.xlu0 %565
    %v568 = vsel %vm556, %v566, 0.0
    %570 = vrot.lane.b32.xlu0 %v568, 32
    %v571 = vpop.permute.xlu0 %570
    %s573 = scalar_lea.vmem %s8, %s433
    %vm574 = vcmask 517376
    %575 = vst.msk [vmem:[%s573] sm:$0x3] %vm574, %v571
    %v576 = vsel %vm556, %v566, %v280
    %v579 = vunpack.c.l.s4 1983009808
    %v580 = vunpack.c.0.s8 %v579
    %v581 = vlaneseq
    %v582 = vshrl.u32 %v581, 7
    %v583 = vsub.s32 %v580, %v582
    %v584 = vrot.slane %v545, %v583
    %585 = vrot.lane.b32.xlu0 %v584, 96
    %v586 = vpop.permute.xlu0 %585
    %v588 = vsel %vm556, %v586, %v281
  $region38: #{lstm_classifier_forward.4} parent=0 // loop_footer
    %s277 = sadd.s32 1, %s273
  $region39: #{lstm_classifier_forward.4} parent=0 // loop_footer_branch
    %272 = sbr.rel target = $region35
  $region40: #{lstm_classifier_forward.4} parent=0 // loop_exit
    _
  // Predicated region
  $region41: #{lstm_classifier_forward.4} parent=0 // pred_check
    _
  $region42: #{lstm_classifier_forward.4} parent=0 // pred_check_branch
    %590 = sbr.rel (0) target = $region44
  $region43: #{lstm_classifier_forward.4} parent=0 // pred_region
    _
  $region44: #{lstm_classifier_forward.4} parent=0 // pred_fallthru
    _
  // Predicated region
  $region45: #{lstm_classifier_forward.4} parent=0 // pred_check
    _
  $region46: #{lstm_classifier_forward.4} parent=0 // pred_check_branch
    %592 = sbr.rel (0) target = $region48
  $region47: #{lstm_classifier_forward.4} parent=0 // pred_region
    _
  $region48: #{lstm_classifier_forward.4} parent=0 // pred_fallthru
    _

// kernel: lstm_classifier_forward.5
$region0: #{lstm_classifier_forward.5}
  #allocation0 [shape = 'u32[]', space=smem, size = 0x4, offset = 0x4, fixed_abs, tag = 'smem constant byte address 0x4 - core index']
  #allocation1 [shape = 'u32[144,128]{1,0:T(1,128)}', space=vmem, size = 0x12000, scoped, tag = 'internal scratch']
  #allocation2 [shape = 'f32[1,1]{1,0:T(1,128)S(1)}', space=vmem, size = 0x200, scoped, tag = 'scoped memory for lstm_classifier_forward.5']
  %s0 = inlined_call_operand.vmem [shape: f32[2,8], index: 0, kind: input, shape index: {}]
  %s1 = inlined_call_operand.vmem [shape: f32[8,2,64], index: 1, kind: input, shape index: {}]
  %s2 = inlined_call_operand.vmem [shape: f32[8,64], index: 2, kind: input, shape index: {}]
  %s3 = inlined_call_operand.vmem [shape: f32[64,32], index: 3, kind: input, shape index: {}]
  %s4 = inlined_call_operand.vmem [shape: f32[1,32], index: 4, kind: input, shape index: {}]
  %s5 = inlined_call_operand.vmem [shape: f32[32,1], index: 5, kind: input, shape index: {}]
  %s6 = inlined_call_operand.<no memory space> [shape: f32[1,1], index: 6, kind: input, shape index: {}]
  %s7 = inlined_call_operand.hbm [shape: f32[2,8], index: 7, kind: output, shape index: {}]
  %s8 = sld [smem:[#allocation0]]
  $region38: #{lstm_classifier_forward.5} parent=0
    _
  %s10 = ssub.s32 1, %s8
  %s11 = scalar_select 0, %s10, %s8
  %v12 = vstv %s6
  %13 = vst [vmem:[#allocation2] sm:$0x1] %v12
  $region1: #{lstm_classifier_forward.5} parent=0
    #allocation3 [shape = 'u8[1024]{0}', space=vmem, size = 0x400, scoped, tag = 'output window, operand 0, single buffered']
    #allocation4 [shape = 's32[1]{0}', space=sflag, size = 0x4, scoped, tag = 'scoped memory for lstm_classifier_forward.5']
    %14 = vsyncpa [#allocation4], 0
    // Predicated region
    $region2: #{lstm_classifier_forward.5} parent=1 // pred_check
      _
    $region3: #{lstm_classifier_forward.5} parent=1 // pred_check_branch
      %16 = sbr.rel (0) target = $region5
    $region4: #{lstm_classifier_forward.5} parent=1 // pred_region
      _
    $region5: #{lstm_classifier_forward.5} parent=1 // pred_fallthru
      _
    // Predicated region
    $region6: #{lstm_classifier_forward.5} parent=1 // pred_check
      _
    $region7: #{lstm_classifier_forward.5} parent=1 // pred_check_branch
      %18 = sbr.rel (0) target = $region9
    $region8: #{lstm_classifier_forward.5} parent=1 // pred_region
      _
    $region9: #{lstm_classifier_forward.5} parent=1 // pred_fallthru
      _
    // Predicated region
    $region10: #{lstm_classifier_forward.5} parent=1 // pred_check
      _
    $region11: #{lstm_classifier_forward.5} parent=1 // pred_check_branch
      %20 = sbr.rel (0) target = $region13
    $region12: #{lstm_classifier_forward.5} parent=1 // pred_region
      _
    $region13: #{lstm_classifier_forward.5} parent=1 // pred_fallthru
      _
    // Predicated region
    $region14: #{lstm_classifier_forward.5} parent=1 // pred_check
      _
    $region15: #{lstm_classifier_forward.5} parent=1 // pred_check_branch
      %22 = sbr.rel (0) target = $region17
    $region16: #{lstm_classifier_forward.5} parent=1 // pred_region
      _
    $region17: #{lstm_classifier_forward.5} parent=1 // pred_fallthru
      _
    // Predicated region
    $region18: #{lstm_classifier_forward.5} parent=1 // pred_check
      _
    $region19: #{lstm_classifier_forward.5} parent=1 // pred_check_branch
      %24 = sbr.rel (0) target = $region21
    $region20: #{lstm_classifier_forward.5} parent=1 // pred_region
      _
    $region21: #{lstm_classifier_forward.5} parent=1 // pred_fallthru
      _
    // Predicated region
    $region22: #{lstm_classifier_forward.5} parent=1 // pred_check
      _
    $region23: #{lstm_classifier_forward.5} parent=1 // pred_check_branch
      %26 = sbr.rel (0) target = $region25
    $region24: #{lstm_classifier_forward.5} parent=1 // pred_region
      _
    $region25: #{lstm_classifier_forward.5} parent=1 // pred_fallthru
      _
    // Predicated region
    $region26: #{lstm_classifier_forward.5} parent=1 // pred_check
      _
    $region27: #{lstm_classifier_forward.5} parent=1 // pred_check_branch
      %28 = sbr.rel (0) target = $region29
    $region28: #{lstm_classifier_forward.5} parent=1 // pred_region
      _
    $region29: #{lstm_classifier_forward.5} parent=1 // pred_fallthru
      _
    %v30 = vld [vmem:[%s1] sm:$0x3]
    %v31 = vld [vmem:[%s1 + $0x2] sm:$0x3]
    %v32 = vld [vmem:[%s1 + $0x4] sm:$0x3]
    %v33 = vld [vmem:[%s1 + $0x6] sm:$0x3]
    %v34 = vld [vmem:[%s1 + $0x8] sm:$0x3]
    %v35 = vld [vmem:[%s1 + $0xa] sm:$0x3]
    %v36 = vld [vmem:[%s1 + $0xc] sm:$0x3]
    %v37 = vld [vmem:[%s1 + $0xe] sm:$0x3]
    %v38 = vld [vmem:[%s0] sm:$0x3]
    %v39 = vld [vmem:[%s2] sm:$0xff]
    %v40 = vpack.c.bf16 %v39, %v39
    %v41 = vld [vmem:[%s3] sm:$0xff]
    %v42 = vld [vmem:[%s3 + $0x8] sm:$0xff]
    %v43 = vld [vmem:[%s3 + $0x10] sm:$0xff]
    %v44 = vld [vmem:[%s3 + $0x18] sm:$0xff]
    %v45 = vld [vmem:[%s3 + $0x20] sm:$0xff]
    %v46 = vld [vmem:[%s3 + $0x28] sm:$0xff]
    %v47 = vld [vmem:[%s3 + $0x30] sm:$0xff]
    %v48 = vld [vmem:[%s3 + $0x38] sm:$0xff]
    %v49 = vpack.c.bf16 %v42, %v41
    %v50 = vpack.c.bf16 %v44, %v43
    %v51 = vpack.c.bf16 %v46, %v45
    %v52 = vpack.c.bf16 %v48, %v47
    %v53 = vld [vmem:[%s5] sm:$0xff]
    %v54 = vld [vmem:[%s5 + $0x8] sm:$0xff]
    %v55 = vld [vmem:[%s5 + $0x10] sm:$0xff]
    %v56 = vld [vmem:[%s5 + $0x18] sm:$0xff]
    %v57 = vpack.c.bf16 %v54, %v53
    %v58 = vpack.c.bf16 %v56, %v55
    %v59 = vld [vmem:[%s4] sm:$0x1]
    %v60 = vld [vmem:[#allocation2] sm:$0x1]
    %v61 = vpack.c.bf16 %v30, %v30
    %v62 = vpack.c.bf16 %v31, %v31
    %v63 = vpack.c.bf16 %v32, %v32
    %v64 = vpack.c.bf16 %v33, %v33
    %v65 = vpack.c.bf16 %v34, %v34
    %v66 = vpack.c.bf16 %v35, %v35
    %v67 = vpack.c.bf16 %v36, %v36
    %v68 = vpack.c.bf16 %v37, %v37
    %vm69 = vcmp.gt.f32.partialorder %v38, 0.0
    %v70 = vsel %vm69, 0.0, -1e+09
    %v71 = vlaneseq
    %v72 = vshrl.u32 %v71, 7
    %v73 = vsub.s32 0, %v72
    %v74 = vrot.slane %v70, %v73
    %v83 = vunpack.c.l.b16 %v61
    %v84 = vunpack.c.l.b16 %v62
    %v85 = vunpack.c.l.b16 %v63
    %v86 = vunpack.c.l.b16 %v64
    %v87 = vunpack.c.l.b16 %v65
    %v88 = vunpack.c.l.b16 %v66
    %v89 = vunpack.c.l.b16 %v67
    %v90 = vunpack.c.l.b16 %v68
    %v91 = vrot.slane %v84, 7
    %vm92 = vcmask 1041409
    %v93 = vsel %vm92, %v91, %v83
    %v94 = vrot.slane %v85, 6
    %vm95 = vcmask 1042434
    %v96 = vsel %vm95, %v94, %v93
    %v97 = vrot.slane %v86, 5
    %vm98 = vcmask 1043459
    %v99 = vsel %vm98, %v97, %v96
    %v100 = vrot.slane %v87, 4
    %vm101 = vcmask 1044484
    %v102 = vsel %vm101, %v100, %v99
    %v103 = vrot.slane %v88, 3
    %vm104 = vcmask 1045509
    %v105 = vsel %vm104, %v103, %v102
    %v106 = vrot.slane %v89, 2
    %vm107 = vcmask 1046534
    %v108 = vsel %vm107, %v106, %v105
    %v109 = vrot.slane %v90, 1
    %vm110 = vcmask 1047559
    %v111 = vsel %vm110, %v109, %v108
    %v112 = vpack.c.b16 %v111, %v111
    %vm113 = vcmask 523264
    %v115 = vsel %vm113, %v40, 0
    %v118 = vsel %vm113, %v112, 0
    %120 = vmatprep.subr.bf16.mxu0 0
    %121 = vmatpush1.bf16.xpose.msra.mxu0 %v118
    %122 = vmatprep.subr.bf16.mxu0 0
    %123 = vmatpush1.bf16.xpose.msra.mxu0 0
    %124 = vmatprep.subr.bf16.mxu0 0
    %125 = vmatpush1.bf16.xpose.msra.mxu0 0
    %126 = vmatprep.subr.bf16.mxu0 0
    %127 = vmatpush1.bf16.xpose.msra.mxu0 0
    %128 = vmatprep.subr.bf16.mxu0 0
    %129 = vmatpush1.bf16.xpose.msra.mxu0 0
    %130 = vmatprep.subr.bf16.mxu0 0
    %131 = vmatpush1.bf16.xpose.msra.mxu0 0
    %132 = vmatprep.subr.bf16.mxu0 0
    %133 = vmatpush1.bf16.xpose.msra.mxu0 0
    %134 = vmatprep.subr.bf16.mxu0 0
    %135 = vmatpush1.bf16.xpose.msra.mxu0 0
    %136 = vmatprep.subr.bf16.mxu0 0
    %137 = vmatpush1.bf16.xpose.msra.mxu0 0
    %138 = vmatprep.subr.bf16.mxu0 0
    %139 = vmatpush1.bf16.xpose.msra.mxu0 0
    %140 = vmatprep.subr.bf16.mxu0 0
    %141 = vmatpush1.bf16.xpose.msra.mxu0 0
    %142 = vmatprep.subr.bf16.mxu0 0
    %143 = vmatpush1.bf16.xpose.msra.mxu0 0
    %144 = vmatprep.subr.bf16.mxu0 0
    %145 = vmatpush1.bf16.xpose.msra.mxu0 0
    %146 = vmatprep.subr.bf16.mxu0 0
    %147 = vmatpush1.bf16.xpose.msra.mxu0 0
    %148 = vmatprep.subr.bf16.mxu0 0
    %149 = vmatpush1.bf16.xpose.msra.mxu0 0
    %150 = vmatprep.subr.bf16.mxu0 0
    %151 = vmatpush1.bf16.xpose.msra.mxu0 0
    %152 = vmatprep.mubr.bf16.mxu0 0
    %153 = vmatmul.mubr.bf16.gmra.mrb[0].mxu0 %v115
    %v154 = vpop.f32.mrb[0].mxu0
    %v155 = vadd.f32 %v74, %v154
    %v156 = vpop.f32.mrb[0].mxu0
    %v157 = vpop.f32.mrb[0].mxu0
    %v158 = vpop.f32.mrb[0].mxu0
    %159 = vdwg.mxu0
    %vm160 = vcmask 64512
    %v161 = vsel %vm160, %v155, -inf
    %162 = vmax.xlane.f32.xlu0 %v161
    %v163 = vpop.xlane.xlu0 %162
    %v164 = vsub.f32 %v155, %v163
    %v165 = vmul.f32 %v164, 1.442695
    %v166 = vpow.pop %v165
    %v167 = vsel %vm160, %v166, 0.0
    %168 = vadd.xlane.f32.xlu0 %v167
    %v169 = vpop.xlane.xlu0 %168
    %v170 = vrcp.pop %v169
    %v171 = vmul.f32 %v166, %v170
    %v172 = vpack.c.bf16 %v171, %v171
    %v174 = vsel %vm160, %v172, 0
    %vm176 = vcmask 1043456
    %v177 = vsel %vm176, %v112, 0
    %179 = vmatprep.subr.bf16.mxu0 0
    %180 = vmatpush1.bf16.msra.mxu0 %v177
    %181 = vmatprep.subr.bf16.mxu0 0
    %182 = vmatpush1.bf16.msra.mxu0 0
    %183 = vmatprep.subr.bf16.mxu0 0
    %184 = vmatpush1.bf16.msra.mxu0 0
    %185 = vmatprep.subr.bf16.mxu0 0
    %186 = vmatpush1.bf16.msra.mxu0 0
    %187 = vmatprep.subr.bf16.mxu0 0
    %188 = vmatpush1.bf16.msra.mxu0 0
    %189 = vmatprep.subr.bf16.mxu0 0
    %190 = vmatpush1.bf16.msra.mxu0 0
    %191 = vmatprep.subr.bf16.mxu0 0
    %192 = vmatpush1.bf16.msra.mxu0 0
    %193 = vmatprep.subr.bf16.mxu0 0
    %194 = vmatpush1.bf16.msra.mxu0 0
    %195 = vmatprep.subr.bf16.mxu0 0
    %196 = vmatpush1.bf16.msra.mxu0 0
    %197 = vmatprep.subr.bf16.mxu0 0
    %198 = vmatpush1.bf16.msra.mxu0 0
    %199 = vmatprep.subr.bf16.mxu0 0
    %200 = vmatpush1.bf16.msra.mxu0 0
    %201 = vmatprep.subr.bf16.mxu0 0
    %202 = vmatpush1.bf16.msra.mxu0 0
    %203 = vmatprep.subr.bf16.mxu0 0
    %204 = vmatpush1.bf16.msra.mxu0 0
    %205 = vmatprep.subr.bf16.mxu0 0
    %206 = vmatpush1.bf16.msra.mxu0 0
    %207 = vmatprep.subr.bf16.mxu0 0
    %208 = vmatpush1.bf16.msra.mxu0 0
    %209 = vmatprep.subr.bf16.mxu0 0
    %210 = vmatpush1.bf16.msra.mxu0 0
    %211 = vmatprep.mubr.bf16.mxu0 0
    %212 = vmatmul.mubr.bf16.gmra.mrb[0].mxu0 %v174
    %v213 = vpop.f32.mrb[0].mxu0
    %v214 = vadd.f32 0.0, %v213
    %v215 = vpop.f32.mrb[0].mxu0
    %v216 = vpop.f32.mrb[0].mxu0
    %v217 = vpop.f32.mrb[0].mxu0
    %218 = vdwg.mxu0
    %v219 = vlaneseq
    %v220 = vshrl.u32 %v219, 7
    %v221 = vsub.s32 1, %v220
    %v222 = vrot.slane %v70, %v221
    %v223 = vrot.slane %v83, 1
    %v224 = vsel %vm92, %v84, %v223
    %v225 = vrot.slane %v85, 7
    %v226 = vsel %vm95, %v225, %v224
    %v227 = vrot.slane %v86, 6
    %v228 = vsel %vm98, %v227, %v226
    %v229 = vrot.slane %v87, 5
    %v230 = vsel %vm101, %v229, %v228
    %v231 = vrot.slane %v88, 4
    %v232 = vsel %vm104, %v231, %v230
    %v233 = vrot.slane %v89, 3
    %v234 = vsel %vm107, %v233, %v232
    %v235 = vrot.slane %v90, 2
    %v236 = vsel %vm110, %v235, %v234
    %v237 = vpack.c.b16 %v236, %v236
    %v239 = vsel %vm113, %v237, 0
    %241 = vmatprep.subr.bf16.mxu0 0
    %242 = vmatpush1.bf16.xpose.msra.mxu0 %v239
    %243 = vmatprep.subr.bf16.mxu0 0
    %244 = vmatpush1.bf16.xpose.msra.mxu0 0
    %245 = vmatprep.subr.bf16.mxu0 0
    %246 = vmatpush1.bf16.xpose.msra.mxu0 0
    %247 = vmatprep.subr.bf16.mxu0 0
    %248 = vmatpush1.bf16.xpose.msra.mxu0 0
    %249 = vmatprep.subr.bf16.mxu0 0
    %250 = vmatpush1.bf16.xpose.msra.mxu0 0
    %251 = vmatprep.subr.bf16.mxu0 0
    %252 = vmatpush1.bf16.xpose.msra.mxu0 0
    %253 = vmatprep.subr.bf16.mxu0 0
    %254 = vmatpush1.bf16.xpose.msra.mxu0 0
    %255 = vmatprep.subr.bf16.mxu0 0
    %256 = vmatpush1.bf16.xpose.msra.mxu0 0
    %257 = vmatprep.subr.bf16.mxu0 0
    %258 = vmatpush1.bf16.xpose.msra.mxu0 0
    %259 = vmatprep.subr.bf16.mxu0 0
    %260 = vmatpush1.bf16.xpose.msra.mxu0 0
    %261 = vmatprep.subr.bf16.mxu0 0
    %262 = vmatpush1.bf16.xpose.msra.mxu0 0
    %263 = vmatprep.subr.bf16.mxu0 0
    %264 = vmatpush1.bf16.xpose.msra.mxu0 0
    %265 = vmatprep.subr.bf16.mxu0 0
    %266 = vmatpush1.bf16.xpose.msra.mxu0 0
    %267 = vmatprep.subr.bf16.mxu0 0
    %268 = vmatpush1.bf16.xpose.msra.mxu0 0
    %269 = vmatprep.subr.bf16.mxu0 0
    %270 = vmatpush1.bf16.xpose.msra.mxu0 0
    %271 = vmatprep.subr.bf16.mxu0 0
    %272 = vmatpush1.bf16.xpose.msra.mxu0 0
    %273 = vmatprep.mubr.bf16.mxu0 0
    %274 = vmatmul.mubr.bf16.gmra.mrb[0].mxu0 %v115
    %v275 = vpop.f32.mrb[0].mxu0
    %v276 = vadd.f32 %v222, %v275
    %v277 = vpop.f32.mrb[0].mxu0
    %v278 = vpop.f32.mrb[0].mxu0
    %v279 = vpop.f32.mrb[0].mxu0
    %280 = vdwg.mxu0
    %v281 = vsel %vm160, %v276, -inf
    %282 = vmax.xlane.f32.xlu0 %v281
    %v283 = vpop.xlane.xlu0 %282
    %v284 = vsub.f32 %v276, %v283
    %v285 = vmul.f32 %v284, 1.442695
    %v286 = vpow.pop %v285
    %v287 = vsel %vm160, %v286, 0.0
    %288 = vadd.xlane.f32.xlu0 %v287
    %v289 = vpop.xlane.xlu0 %288
    %v290 = vrcp.pop %v289
    %v291 = vmul.f32 %v286, %v290
    %v292 = vpack.c.bf16 %v291, %v291
    %v294 = vsel %vm160, %v292, 0
    %v296 = vsel %vm176, %v237, 0
    %298 = vmatprep.subr.bf16.mxu0 0
    %299 = vmatpush1.bf16.msra.mxu0 %v296
    %300 = vmatprep.subr.bf16.mxu0 0
    %301 = vmatpush1.bf16.msra.mxu0 0
    %302 = vmatprep.subr.bf16.mxu0 0
    %303 = vmatpush1.bf16.msra.mxu0 0
    %304 = vmatprep.subr.bf16.mxu0 0
    %305 = vmatpush1.bf16.msra.mxu0 0
    %306 = vmatprep.subr.bf16.mxu0 0
    %307 = vmatpush1.bf16.msra.mxu0 0
    %308 = vmatprep.subr.bf16.mxu0 0
    %309 = vmatpush1.bf16.msra.mxu0 0
    %310 = vmatprep.subr.bf16.mxu0 0
    %311 = vmatpush1.bf16.msra.mxu0 0
    %312 = vmatprep.subr.bf16.mxu0 0
    %313 = vmatpush1.bf16.msra.mxu0 0
    %314 = vmatprep.subr.bf16.mxu0 0
    %315 = vmatpush1.bf16.msra.mxu0 0
    %316 = vmatprep.subr.bf16.mxu0 0
    %317 = vmatpush1.bf16.msra.mxu0 0
    %318 = vmatprep.subr.bf16.mxu0 0
    %319 = vmatpush1.bf16.msra.mxu0 0
    %320 = vmatprep.subr.bf16.mxu0 0
    %321 = vmatpush1.bf16.msra.mxu0 0
    %322 = vmatprep.subr.bf16.mxu0 0
    %323 = vmatpush1.bf16.msra.mxu0 0
    %324 = vmatprep.subr.bf16.mxu0 0
    %325 = vmatpush1.bf16.msra.mxu0 0
    %326 = vmatprep.subr.bf16.mxu0 0
    %327 = vmatpush1.bf16.msra.mxu0 0
    %328 = vmatprep.subr.bf16.mxu0 0
    %329 = vmatpush1.bf16.msra.mxu0 0
    %330 = vmatprep.mubr.bf16.mxu0 0
    %331 = vmatmul.mubr.bf16.gmra.mrb[0].mxu0 %v294
    %v332 = vpop.f32.mrb[0].mxu0
    %v333 = vadd.f32 0.0, %v332
    %v334 = vpop.f32.mrb[0].mxu0
    %v335 = vpop.f32.mrb[0].mxu0
    %v336 = vpop.f32.mrb[0].mxu0
    %337 = vdwg.mxu0
    %v338 = vpack.c.bf16 %v333, %v214
    %v340 = vlaneseq
    %v341 = vshrl.u32 %v340, 7
    %v342 = vsub.s32 0, %v341
    %v343 = vrot.slane %v59, %v342
    %v346 = vsel %vm113, %v338, 0
    %348 = vmatprep.subr.bf16.mxu0 0
    %349 = vmatpush1.bf16.msra.mxu0 %v49
    %350 = vmatprep.subr.bf16.mxu0 0
    %351 = vmatpush1.bf16.msra.mxu0 %v50
    %352 = vmatprep.subr.bf16.mxu0 0
    %353 = vmatpush1.bf16.msra.mxu0 %v51
    %354 = vmatprep.subr.bf16.mxu0 0
    %355 = vmatpush1.bf16.msra.mxu0 %v52
    %356 = vmatprep.subr.bf16.mxu0 0
    %357 = vmatpush1.bf16.msra.mxu0 0
    %358 = vmatprep.subr.bf16.mxu0 0
    %359 = vmatpush1.bf16.msra.mxu0 0
    %360 = vmatprep.subr.bf16.mxu0 0
    %361 = vmatpush1.bf16.msra.mxu0 0
    %362 = vmatprep.subr.bf16.mxu0 0
    %363 = vmatpush1.bf16.msra.mxu0 0
    %364 = vmatprep.subr.bf16.mxu0 0
    %365 = vmatpush1.bf16.msra.mxu0 0
    %366 = vmatprep.subr.bf16.mxu0 0
    %367 = vmatpush1.bf16.msra.mxu0 0
    %368 = vmatprep.subr.bf16.mxu0 0
    %369 = vmatpush1.bf16.msra.mxu0 0
    %370 = vmatprep.subr.bf16.mxu0 0
    %371 = vmatpush1.bf16.msra.mxu0 0
    %372 = vmatprep.subr.bf16.mxu0 0
    %373 = vmatpush1.bf16.msra.mxu0 0
    %374 = vmatprep.subr.bf16.mxu0 0
    %375 = vmatpush1.bf16.msra.mxu0 0
    %376 = vmatprep.subr.bf16.mxu0 0
    %377 = vmatpush1.bf16.msra.mxu0 0
    %378 = vmatprep.subr.bf16.mxu0 0
    %379 = vmatpush1.bf16.msra.mxu0 0
    %380 = vmatprep.mubr.bf16.mxu0 0
    %381 = vmatmul.mubr.bf16.gmra.mrb[0].mxu0 %v346
    %v382 = vpop.f32.mrb[0].mxu0
    %v383 = vadd.f32 %v343, %v382
    %v384 = vpop.f32.mrb[0].mxu0
    %v385 = vpop.f32.mrb[0].mxu0
    %v386 = vadd.f32 %v343, %v385
    %v387 = vpop.f32.mrb[0].mxu0
    %388 = vdwg.mxu0
    %v389 = vmax.f32 %v383, 0.0
    %v390 = vmax.f32 %v386, 0.0
    %v391 = vpack.c.bf16 %v389, %v389
    %v393 = vlaneseq
    %v394 = vshrl.u32 %v393, 7
    %v395 = vsub.s32 0, %v394
    %v396 = vrot.slane %v60, %v395
    %vm398 = vcmask 261120
    %v400 = vsel %vm398, %v391, 0
    %402 = vmatprep.subr.bf16.mxu0 0
    %403 = vmatpush1.bf16.msra.mxu0 %v57
    %404 = vmatprep.subr.bf16.mxu0 0
    %405 = vmatpush1.bf16.msra.mxu0 %v58
    %406 = vmatprep.subr.bf16.mxu0 0
    %407 = vmatpush1.bf16.msra.mxu0 0
    %408 = vmatprep.subr.bf16.mxu0 0
    %409 = vmatpush1.bf16.msra.mxu0 0
    %410 = vmatprep.subr.bf16.mxu0 0
    %411 = vmatpush1.bf16.msra.mxu0 0
    %412 = vmatprep.subr.bf16.mxu0 0
    %413 = vmatpush1.bf16.msra.mxu0 0
    %414 = vmatprep.subr.bf16.mxu0 0
    %415 = vmatpush1.bf16.msra.mxu0 0
    %416 = vmatprep.subr.bf16.mxu0 0
    %417 = vmatpush1.bf16.msra.mxu0 0
    %418 = vmatprep.subr.bf16.mxu0 0
    %419 = vmatpush1.bf16.msra.mxu0 0
    %420 = vmatprep.subr.bf16.mxu0 0
    %421 = vmatpush1.bf16.msra.mxu0 0
    %422 = vmatprep.subr.bf16.mxu0 0
    %423 = vmatpush1.bf16.msra.mxu0 0
    %424 = vmatprep.subr.bf16.mxu0 0
    %425 = vmatpush1.bf16.msra.mxu0 0
    %426 = vmatprep.subr.bf16.mxu0 0
    %427 = vmatpush1.bf16.msra.mxu0 0
    %428 = vmatprep.subr.bf16.mxu0 0
    %429 = vmatpush1.bf16.msra.mxu0 0
    %430 = vmatprep.subr.bf16.mxu0 0
    %431 = vmatpush1.bf16.msra.mxu0 0
    %432 = vmatprep.subr.bf16.mxu0 0
    %433 = vmatpush1.bf16.msra.mxu0 0
    %434 = vmatprep.mubr.bf16.mxu0 0
    %435 = vmatmul.mubr.bf16.gmra.mrb[0].mxu0 %v400
    %v436 = vpop.f32.mrb[0].mxu0
    %v437 = vadd.f32 %v396, %v436
    %v438 = vpop.f32.mrb[0].mxu0
    %v439 = vpop.f32.mrb[0].mxu0
    %v440 = vpop.f32.mrb[0].mxu0
    %441 = vdwg.mxu0
    %442 = vxpose.xlu0.b32.start [1/16] %v437, 128
    %443 = vxpose.xlu0.b32.cont [2/16] 0.0, 128
    %444 = vxpose.xlu0.b32.cont [3/16] 0.0, 128
    %445 = vxpose.xlu0.b32.cont [4/16] 0.0, 128
    %446 = vxpose.xlu0.b32.cont [5/16] 0.0, 128
    %447 = vxpose.xlu0.b32.cont [6/16] 0.0, 128
    %448 = vxpose.xlu0.b32.cont [7/16] 0.0, 128
    %449 = vxpose.xlu0.b32.cont [8/16] 0.0, 128
    %450 = vxpose.xlu0.b32.cont [9/16] 0.0, 128
    %451 = vxpose.xlu0.b32.cont [10/16] 0.0, 128
    %452 = vxpose.xlu0.b32.cont [11/16] 0.0, 128
    %453 = vxpose.xlu0.b32.cont [12/16] 0.0, 128
    %454 = vxpose.xlu0.b32.cont [13/16] 0.0, 128
    %455 = vxpose.xlu0.b32.cont [14/16] 0.0, 128
    %456 = vxpose.xlu0.b32.cont [15/16] 0.0, 128
    %457 = vxpose.xlu0.b32.end [16/16] 0.0, 128
    %v458 = vpop.trf.xlu0
    %v459 = vpop.trf.xlu0
    %v460 = vpop.trf.xlu0
    %v461 = vpop.trf.xlu0
    %v462 = vpop.trf.xlu0
    %v463 = vpop.trf.xlu0
    %v464 = vpop.trf.xlu0
    %v465 = vpop.trf.xlu0
    %v466 = vpop.trf.xlu0
    %v467 = vpop.trf.xlu0
    %v468 = vpop.trf.xlu0
    %v469 = vpop.trf.xlu0
    %v470 = vpop.trf.xlu0
    %v471 = vpop.trf.xlu0
    %v472 = vpop.trf.xlu0
    %v473 = vpop.trf.xlu0
    %v474 = vpack.c.bf16 %v390, %v390
    %v476 = vsel %vm398, %v474, 0
    %478 = vmatprep.subr.bf16.mxu0 0
    %479 = vmatpush1.bf16.msra.mxu0 %v57
    %480 = vmatprep.subr.bf16.mxu0 0
    %481 = vmatpush1.bf16.msra.mxu0 %v58
    %482 = vmatprep.subr.bf16.mxu0 0
    %483 = vmatpush1.bf16.msra.mxu0 0
    %484 = vmatprep.subr.bf16.mxu0 0
    %485 = vmatpush1.bf16.msra.mxu0 0
    %486 = vmatprep.subr.bf16.mxu0 0
    %487 = vmatpush1.bf16.msra.mxu0 0
    %488 = vmatprep.subr.bf16.mxu0 0
    %489 = vmatpush1.bf16.msra.mxu0 0
    %490 = vmatprep.subr.bf16.mxu0 0
    %491 = vmatpush1.bf16.msra.mxu0 0
    %492 = vmatprep.subr.bf16.mxu0 0
    %493 = vmatpush1.bf16.msra.mxu0 0
    %494 = vmatprep.subr.bf16.mxu0 0
    %495 = vmatpush1.bf16.msra.mxu0 0
    %496 = vmatprep.subr.bf16.mxu0 0
    %497 = vmatpush1.bf16.msra.mxu0 0
    %498 = vmatprep.subr.bf16.mxu0 0
    %499 = vmatpush1.bf16.msra.mxu0 0
    %500 = vmatprep.subr.bf16.mxu0 0
    %501 = vmatpush1.bf16.msra.mxu0 0
    %502 = vmatprep.subr.bf16.mxu0 0
    %503 = vmatpush1.bf16.msra.mxu0 0
    %504 = vmatprep.subr.bf16.mxu0 0
    %505 = vmatpush1.bf16.msra.mxu0 0
    %506 = vmatprep.subr.bf16.mxu0 0
    %507 = vmatpush1.bf16.msra.mxu0 0
    %508 = vmatprep.subr.bf16.mxu0 0
    %509 = vmatpush1.bf16.msra.mxu0 0
    %510 = vmatprep.mubr.bf16.mxu0 0
    %511 = vmatmul.mubr.bf16.gmra.mrb[0].mxu0 %v476
    %v512 = vpop.f32.mrb[0].mxu0
    %v513 = vadd.f32 %v396, %v512
    %v514 = vpop.f32.mrb[0].mxu0
    %v515 = vpop.f32.mrb[0].mxu0
    %v516 = vpop.f32.mrb[0].mxu0
    %517 = vdwg.mxu0
    %518 = vxpose.xlu0.b32.start [1/16] %v513, 128
    %519 = vxpose.xlu0.b32.cont [2/16] 0.0, 128
    %520 = vxpose.xlu0.b32.cont [3/16] 0.0, 128
    %521 = vxpose.xlu0.b32.cont [4/16] 0.0, 128
    %522 = vxpose.xlu0.b32.cont [5/16] 0.0, 128
    %523 = vxpose.xlu0.b32.cont [6/16] 0.0, 128
    %524 = vxpose.xlu0.b32.cont [7/16] 0.0, 128
    %525 = vxpose.xlu0.b32.cont [8/16] 0.0, 128
    %526 = vxpose.xlu0.b32.cont [9/16] 0.0, 128
    %527 = vxpose.xlu0.b32.cont [10/16] 0.0, 128
    %528 = vxpose.xlu0.b32.cont [11/16] 0.0, 128
    %529 = vxpose.xlu0.b32.cont [12/16] 0.0, 128
    %530 = vxpose.xlu0.b32.cont [13/16] 0.0, 128
    %531 = vxpose.xlu0.b32.cont [14/16] 0.0, 128
    %532 = vxpose.xlu0.b32.cont [15/16] 0.0, 128
    %533 = vxpose.xlu0.b32.end [16/16] 0.0, 128
    %v534 = vpop.trf.xlu0
    %v535 = vpop.trf.xlu0
    %v536 = vpop.trf.xlu0
    %v537 = vpop.trf.xlu0
    %v538 = vpop.trf.xlu0
    %v539 = vpop.trf.xlu0
    %v540 = vpop.trf.xlu0
    %v541 = vpop.trf.xlu0
    %v542 = vpop.trf.xlu0
    %v543 = vpop.trf.xlu0
    %v544 = vpop.trf.xlu0
    %v545 = vpop.trf.xlu0
    %v546 = vpop.trf.xlu0
    %v547 = vpop.trf.xlu0
    %v548 = vpop.trf.xlu0
    %v549 = vpop.trf.xlu0
    %v551 = vrot.slane %v534, 7
    %vm553 = vcmask 1040384
    %v554 = vsel %vm553, %v458, %v551
    %vm555 = vcmask 58368
    %556 = vst.msk [vmem:[#allocation3] sm:$0x3] %vm555, %v554
    // Predicated region
    $region30: #{lstm_classifier_forward.5} parent=1 // pred_check
      _
    $region31: #{lstm_classifier_forward.5} parent=1 // pred_check_branch
      %558 = sbr.rel (0) target = $region33
    $region32: #{lstm_classifier_forward.5} parent=1 // pred_region
      %s560 = ssub.s32 32, 32
      %561 = vsyncadd [#allocation4], %s560
      %s563 = sshll.u32 [#allocation3], 4
      %s564 = int_to_ptr.vmem [resolvable:$true] %s563
      %566 = dma.vmem_to_hbm [thread:$0]  %s564, 32, %s7, [#allocation4]
    $region33: #{lstm_classifier_forward.5} parent=1 // pred_fallthru
      _
    // Predicated region
    $region34: #{lstm_classifier_forward.5} parent=1 // pred_check
      _
    $region35: #{lstm_classifier_forward.5} parent=1 // pred_check_branch
      %568 = sbr.rel (0) target = $region37
    $region36: #{lstm_classifier_forward.5} parent=1 // pred_region
      %569 = dma.done [#allocation4], 32
    $region37: #{lstm_classifier_forward.5} parent=1 // pred_fallthru
      _
    %570 = vsyncpa [#allocation4], 1

// kernel: lstm_classifier_forward.3
$region0: #{lstm_classifier_forward.3}
  #allocation0 [shape = 'u32[]', space=smem, size = 0x4, offset = 0x4, fixed_abs, tag = 'smem constant byte address 0x4 - core index']
  #allocation1 [shape = 'u32[144,128]{1,0:T(1,128)}', space=vmem, size = 0x12000, scoped, tag = 'internal scratch']
  #allocation2 [shape = 'f32[8,2,256]{2,1,0:T(2,128)}', space=vmem, size = 0x4000, scoped, tag = 'scratch operand']
  %s0 = inlined_call_operand.vmem [shape: f32[8,2,1], index: 0, kind: input, shape index: {}]
  %s1 = inlined_call_operand.vmem [shape: bf16[8,2,16], index: 1, kind: input, shape index: {}]
  %s2 = inlined_call_operand.vmem [shape: bf16[16,256], index: 2, kind: input, shape index: {}]
  %s3 = inlined_call_operand.vmem [shape: f32[32,128], index: 3, kind: input, shape index: {}]
  %s4 = inlined_call_operand.vmem [shape: f32[32,128], index: 4, kind: input, shape index: {}]
  %s5 = inlined_call_operand.vmem [shape: f32[1,256], index: 5, kind: input, shape index: {}]
  %s6 = inlined_call_operand.vmem [shape: f32[2,2,32], index: 6, kind: input, shape index: {}]
  %s7 = inlined_call_operand.vmem [shape: f32[2,2,32], index: 7, kind: input, shape index: {}]
  %s8 = inlined_call_operand.vmem [shape: f32[8,2,64], index: 8, kind: output, shape index: {}]
  %s9 = sld [smem:[#allocation0]]
  $region49: #{lstm_classifier_forward.3} parent=0
    _
  %s11 = ssub.s32 1, %s9
  %s12 = scalar_select 0, %s11, %s9
  // Predicated region
  $region2: #{lstm_classifier_forward.3} parent=0 // pred_check
    _
  $region3: #{lstm_classifier_forward.3} parent=0 // pred_check_branch
    %14 = sbr.rel (0) target = $region5
  $region4: #{lstm_classifier_forward.3} parent=0 // pred_region
    _
  $region5: #{lstm_classifier_forward.3} parent=0 // pred_fallthru
    _
  // Predicated region
  $region6: #{lstm_classifier_forward.3} parent=0 // pred_check
    _
  $region7: #{lstm_classifier_forward.3} parent=0 // pred_check_branch
    %16 = sbr.rel (0) target = $region9
  $region8: #{lstm_classifier_forward.3} parent=0 // pred_region
    _
  $region9: #{lstm_classifier_forward.3} parent=0 // pred_fallthru
    _
  // Predicated region
  $region10: #{lstm_classifier_forward.3} parent=0 // pred_check
    _
  $region11: #{lstm_classifier_forward.3} parent=0 // pred_check_branch
    %18 = sbr.rel (0) target = $region13
  $region12: #{lstm_classifier_forward.3} parent=0 // pred_region
    _
  $region13: #{lstm_classifier_forward.3} parent=0 // pred_fallthru
    _
  // Predicated region
  $region14: #{lstm_classifier_forward.3} parent=0 // pred_check
    _
  $region15: #{lstm_classifier_forward.3} parent=0 // pred_check_branch
    %20 = sbr.rel (0) target = $region17
  $region16: #{lstm_classifier_forward.3} parent=0 // pred_region
    _
  $region17: #{lstm_classifier_forward.3} parent=0 // pred_fallthru
    _
  // Predicated region
  $region18: #{lstm_classifier_forward.3} parent=0 // pred_check
    _
  $region19: #{lstm_classifier_forward.3} parent=0 // pred_check_branch
    %22 = sbr.rel (0) target = $region21
  $region20: #{lstm_classifier_forward.3} parent=0 // pred_region
    _
  $region21: #{lstm_classifier_forward.3} parent=0 // pred_fallthru
    _
  // Predicated region
  $region22: #{lstm_classifier_forward.3} parent=0 // pred_check
    _
  $region23: #{lstm_classifier_forward.3} parent=0 // pred_check_branch
    %24 = sbr.rel (0) target = $region25
  $region24: #{lstm_classifier_forward.3} parent=0 // pred_region
    _
  $region25: #{lstm_classifier_forward.3} parent=0 // pred_fallthru
    _
  // Predicated region
  $region26: #{lstm_classifier_forward.3} parent=0 // pred_check
    _
  $region27: #{lstm_classifier_forward.3} parent=0 // pred_check_branch
    %26 = sbr.rel (0) target = $region29
  $region28: #{lstm_classifier_forward.3} parent=0 // pred_region
    _
  $region29: #{lstm_classifier_forward.3} parent=0 // pred_fallthru
    _
  // Predicated region
  $region30: #{lstm_classifier_forward.3} parent=0 // pred_check
    _
  $region31: #{lstm_classifier_forward.3} parent=0 // pred_check_branch
    %28 = sbr.rel (0) target = $region33
  $region32: #{lstm_classifier_forward.3} parent=0 // pred_region
    _
  $region33: #{lstm_classifier_forward.3} parent=0 // pred_fallthru
    _
  %v30 = vld [vmem:[%s1] sm:$0x1]
  %v31 = vld [vmem:[%s1 + $0x1] sm:$0x1]
  %v32 = vld [vmem:[%s1 + $0x2] sm:$0x1]
  %v33 = vld [vmem:[%s1 + $0x3] sm:$0x1]
  %v34 = vld [vmem:[%s1 + $0x4] sm:$0x1]
  %v35 = vld [vmem:[%s1 + $0x5] sm:$0x1]
  %v36 = vld [vmem:[%s1 + $0x6] sm:$0x1]
  %v37 = vld [vmem:[%s1 + $0x7] sm:$0x1]
  %v38 = vld [vmem:[%s2] sm:$0xff]
  %v39 = vld [vmem:[%s2 + $0x8] sm:$0xff]
  %v40 = vld [vmem:[%s5] sm:$0x3]
  %v42 = vlaneseq
  %v43 = vshrl.u32 %v42, 7
  %v44 = vsub.s32 0, %v43
  %v45 = vrot.slane %v40, %v44
  %v46 = vlaneseq
  %v47 = vshrl.u32 %v46, 7
  %v48 = vsub.s32 1, %v47
  %v49 = vrot.slane %v40, %v48
  %v60 = vcombine.low %v30, %v31
  %v61 = vcombine.low %v32, %v33
  %v62 = vcombine.low %v34, %v35
  %v63 = vcombine.low %v36, %v37
  %v65 = vunpack.c.l.s4 1966171168
  %v66 = vunpack.c.0.s8 %v65
  %v67 = vlaneseq
  %v68 = vshrl.u32 %v67, 7
  %v69 = vsub.s32 %v66, %v68
  %v70 = vrot.slane %v60, %v69
  %v72 = vunpack.c.l.s4 1966171168
  %v73 = vunpack.c.0.s8 %v72
  %v74 = vlaneseq
  %v75 = vshrl.u32 %v74, 7
  %v76 = vsub.s32 %v73, %v75
  %v77 = vrot.slane %v61, %v76
  %v79 = vunpack.c.l.s4 1966171168
  %v80 = vunpack.c.0.s8 %v79
  %v81 = vlaneseq
  %v82 = vshrl.u32 %v81, 7
  %v83 = vsub.s32 %v80, %v82
  %v84 = vrot.slane %v62, %v83
  %v86 = vunpack.c.l.s4 1966171168
  %v87 = vunpack.c.0.s8 %v86
  %v88 = vlaneseq
  %v89 = vshrl.u32 %v88, 7
  %v90 = vsub.s32 %v87, %v89
  %v91 = vrot.slane %v63, %v90
  %v92 = vcombine.low %v70, %v77
  %v93 = vcombine.low %v84, %v91
  %v95 = vunpack.c.l.s4 1966171168
  %v96 = vunpack.c.0.s8 %v95
  %v97 = vlaneseq
  %v98 = vshrl.u32 %v97, 7
  %v99 = vsub.s32 %v96, %v98
  %v100 = vrot.slane %v92, %v99
  %v102 = vunpack.c.l.s4 1966171168
  %v103 = vunpack.c.0.s8 %v102
  %v104 = vlaneseq
  %v105 = vshrl.u32 %v104, 7
  %v106 = vsub.s32 %v103, %v105
  %v107 = vrot.slane %v93, %v106
  %v108 = vcombine.low %v100, %v107
  %v111 = vunpack.c.l.b16 %v38
  %v112 = vunpack.c.h.b16 %v38
  %v113 = vunpack.c.l.b16 %v39
  %v114 = vunpack.c.h.b16 %v39
  %v115 = vpack.c.b16 %v113, %v111
  %v116 = vpack.c.b16 %v114, %v112
  %vm119 = vcmask 130048
  %v121 = vsel %vm119, %v108, 0
  %123 = vmatprep.subr.bf16.mxu0 %v116
  %124 = vmatpush1.bf16.msra.mxu0 %v115
  %125 = vmatprep.subr.bf16.mxu0 0
  %126 = vmatpush1.bf16.msra.mxu0 0
  %127 = vmatprep.subr.bf16.mxu0 0
  %128 = vmatpush1.bf16.msra.mxu0 0
  %129 = vmatprep.subr.bf16.mxu0 0
  %130 = vmatpush1.bf16.msra.mxu0 0
  %131 = vmatprep.subr.bf16.mxu0 0
  %132 = vmatpush1.bf16.msra.mxu0 0
  %133 = vmatprep.subr.bf16.mxu0 0
  %134 = vmatpush1.bf16.msra.mxu0 0
  %135 = vmatprep.subr.bf16.mxu0 0
  %136 = vmatpush1.bf16.msra.mxu0 0
  %137 = vmatprep.subr.bf16.mxu0 0
  %138 = vmatpush1.bf16.msra.mxu0 0
  %139 = vmatprep.subr.bf16.mxu0 0
  %140 = vmatpush1.bf16.msra.mxu0 0
  %141 = vmatprep.subr.bf16.mxu0 0
  %142 = vmatpush1.bf16.msra.mxu0 0
  %143 = vmatprep.subr.bf16.mxu0 0
  %144 = vmatpush1.bf16.msra.mxu0 0
  %145 = vmatprep.subr.bf16.mxu0 0
  %146 = vmatpush1.bf16.msra.mxu0 0
  %147 = vmatprep.subr.bf16.mxu0 0
  %148 = vmatpush1.bf16.msra.mxu0 0
  %149 = vmatprep.subr.bf16.mxu0 0
  %150 = vmatpush1.bf16.msra.mxu0 0
  %151 = vmatprep.subr.bf16.mxu0 0
  %152 = vmatpush1.bf16.msra.mxu0 0
  %153 = vmatprep.subr.bf16.mxu0 0
  %154 = vmatpush1.bf16.msra.mxu0 0
  %155 = vmatprep.mubr.bf16.mxu0 0
  %156 = vmatmul.mubr.bf16.gmra.mrb[0].mxu0 %v121
  %v157 = vpop.f32.mrb[0].mxu0
  %v158 = vadd.f32 %v45, %v157
  %v159 = vpop.f32.mrb[0].mxu0
  %v160 = vadd.f32 %v49, %v159
  %v161 = vpop.f32.mrb[0].mxu0
  %v162 = vadd.f32 %v45, %v161
  %v163 = vpop.f32.mrb[0].mxu0
  %v164 = vadd.f32 %v49, %v163
  %165 = vdwg.mxu0
  %v170 = vcombine.low %v158, %v160
  %v171 = vcombine.high %v158, %v160
  %v173 = vunpack.c.l.s4 1983009808
  %v174 = vunpack.c.0.s8 %v173
  %v175 = vlaneseq
  %v176 = vshrl.u32 %v175, 7
  %v177 = vsub.s32 %v174, %v176
  %v178 = vrot.slane %v170, %v177
  %v180 = vunpack.c.l.s4 1983009808
  %v181 = vunpack.c.0.s8 %v180
  %v182 = vlaneseq
  %v183 = vshrl.u32 %v182, 7
  %v184 = vsub.s32 %v181, %v183
  %v185 = vrot.slane %v171, %v184
  %v186 = vcombine.high %v178, %v178
  %v187 = vcombine.high %v185, %v185
  %v188 = vcombine.low %v162, %v164
  %v189 = vcombine.high %v162, %v164
  %v191 = vunpack.c.l.s4 1983009808
  %v192 = vunpack.c.0.s8 %v191
  %v193 = vlaneseq
  %v194 = vshrl.u32 %v193, 7
  %v195 = vsub.s32 %v192, %v194
  %v196 = vrot.slane %v188, %v195
  %v198 = vunpack.c.l.s4 1983009808
  %v199 = vunpack.c.0.s8 %v198
  %v200 = vlaneseq
  %v201 = vshrl.u32 %v200, 7
  %v202 = vsub.s32 %v199, %v201
  %v203 = vrot.slane %v189, %v202
  %v204 = vcombine.high %v196, %v196
  %v205 = vcombine.high %v203, %v203
  %214 = vst [vmem:[#allocation2] sm:$0xf] %v178
  %215 = vst [vmem:[#allocation2 + $0x4] sm:$0xf] %v186
  %216 = vst [vmem:[#allocation2 + $0x8] sm:$0xf] %v185
  %217 = vst [vmem:[#allocation2 + $0xc] sm:$0xf] %v187
  %218 = vst [vmem:[#allocation2 + $0x10] sm:$0xf] %v196
  %219 = vst [vmem:[#allocation2 + $0x14] sm:$0xf] %v204
  %220 = vst [vmem:[#allocation2 + $0x18] sm:$0xf] %v203
  %221 = vst [vmem:[#allocation2 + $0x1c] sm:$0xf] %v205
  %v222 = vld [vmem:[%s3] sm:$0xff]
  %v223 = vld [vmem:[%s3 + $0x8] sm:$0xff]
  %v224 = vld [vmem:[%s3 + $0x10] sm:$0xff]
  %v225 = vld [vmem:[%s3 + $0x18] sm:$0xff]
  %v226 = vld [vmem:[%s4] sm:$0xff]
  %v227 = vld [vmem:[%s4 + $0x8] sm:$0xff]
  %v228 = vld [vmem:[%s4 + $0x10] sm:$0xff]
  %v229 = vld [vmem:[%s4 + $0x18] sm:$0xff]
  %v230 = vld [vmem:[%s6] sm:$0x3]
  %v231 = vld [vmem:[%s7] sm:$0x3]
  %s232 = scalar_lea.vmem %s6, 2
  %v233 = vld [vmem:[%s232] sm:$0x3]
  %s234 = scalar_lea.vmem %s7, 2
  %v235 = vld [vmem:[%s234] sm:$0x3]
  loop: start=0, step=1, limit=8
  $region34: #{lstm_classifier_forward.3} parent=0 // loop_pre_header
    _
  $region35: #{lstm_classifier_forward.3} parent=0 // loop_header
    %s237 = sphi 0, %s241
    %p238 = scmp.ge.s32.totalorder %s237, 8
    %v242 = vphi %v230, %v384
    %v243 = vphi %v231, %v396
    %v244 = vphi %v233, %v540
    %v245 = vphi %v235, %v552
  $region36: #{lstm_classifier_forward.3} parent=0 // loop_header_branch
    %240 = sbr.rel (%p238) target = $region40
  $region37: #{lstm_classifier_forward.3} parent=0 // loop_body
    %s246 = ssub.s32 7, %s237
    %s247 = smul.u32 %s237, 2
    %s248 = scalar_lea.vmem %s0, %s247
    %v249 = vld [vmem:[%s248] sm:$0x3]
    %vm250 = vcmp.gt.f32.partialorder %v249, 0.0
    %s251 = smul.addr %s247, 2
    %s252 = scalar_lea.vmem [#allocation2], %s251
    %v253 = vld [vmem:[%s252] sm:$0xf]
    %vm254 = vcmask 261120
    %v256 = vsel %vm254, %v242, 0
    %258 = vmatprep.subr.mxu0 0.0
    %259 = vmatpush1.msra.mxu0 %v222
    %260 = vmatprep.subr.mxu0 0.0
    %261 = vmatpush1.msra.mxu0 %v223
    %262 = vmatprep.subr.mxu0 0.0
    %263 = vmatpush1.msra.mxu0 %v224
    %264 = vmatprep.subr.mxu0 0.0
    %265 = vmatpush1.msra.mxu0 %v225
    %266 = vmatprep.subr.mxu0 0.0
    %267 = vmatpush1.msra.mxu0 0.0
    %268 = vmatprep.subr.mxu0 0.0
    %269 = vmatpush1.msra.mxu0 0.0
    %270 = vmatprep.subr.mxu0 0.0
    %271 = vmatpush1.msra.mxu0 0.0
    %272 = vmatprep.subr.mxu0 0.0
    %273 = vmatpush1.msra.mxu0 0.0
    %274 = vmatprep.subr.mxu0 0.0
    %275 = vmatpush1.msra.mxu0 0.0
    %276 = vmatprep.subr.mxu0 0.0
    %277 = vmatpush1.msra.mxu0 0.0
    %278 = vmatprep.subr.mxu0 0.0
    %279 = vmatpush1.msra.mxu0 0.0
    %280 = vmatprep.subr.mxu0 0.0
    %281 = vmatpush1.msra.mxu0 0.0
    %282 = vmatprep.subr.mxu0 0.0
    %283 = vmatpush1.msra.mxu0 0.0
    %284 = vmatprep.subr.mxu0 0.0
    %285 = vmatpush1.msra.mxu0 0.0
    %286 = vmatprep.subr.mxu0 0.0
    %287 = vmatpush1.msra.mxu0 0.0
    %288 = vmatprep.subr.mxu0 0.0
    %289 = vmatpush1.msra.mxu0 0.0
    %290 = vmatprep.subr.mxu0 0.0
    %291 = vmatpush1.msra.mxu0 0.0
    %292 = vmatprep.subr.mxu0 0.0
    %293 = vmatpush1.msra.mxu0 0.0
    %294 = vmatprep.subr.mxu0 0.0
    %295 = vmatpush1.msra.mxu0 0.0
    %296 = vmatprep.subr.mxu0 0.0
    %297 = vmatpush1.msra.mxu0 0.0
    %298 = vmatprep.subr.mxu0 0.0
    %299 = vmatpush1.msra.mxu0 0.0
    %300 = vmatprep.subr.mxu0 0.0
    %301 = vmatpush1.msra.mxu0 0.0
    %302 = vmatprep.subr.mxu0 0.0
    %303 = vmatpush1.msra.mxu0 0.0
    %304 = vmatprep.subr.mxu0 0.0
    %305 = vmatpush1.msra.mxu0 0.0
    %306 = vmatprep.subr.mxu0 0.0
    %307 = vmatpush1.msra.mxu0 0.0
    %308 = vmatprep.subr.mxu0 0.0
    %309 = vmatpush1.msra.mxu0 0.0
    %310 = vmatprep.subr.mxu0 0.0
    %311 = vmatpush1.msra.mxu0 0.0
    %312 = vmatprep.subr.mxu0 0.0
    %313 = vmatpush1.msra.mxu0 0.0
    %314 = vmatprep.subr.mxu0 0.0
    %315 = vmatpush1.msra.mxu0 0.0
    %316 = vmatprep.subr.mxu0 0.0
    %317 = vmatpush1.msra.mxu0 0.0
    %318 = vmatprep.subr.mxu0 0.0
    %319 = vmatpush1.msra.mxu0 0.0
    %320 = vmatprep.subr.mxu0 0.0
    %321 = vmatpush1.msra.mxu0 0.0
    %322 = vmatprep.mubr.f32.mxu0 0.0
    %323 = vmatmul.mubr.f32.gmra.mrb[0].mxu0 %v256
    %v324 = vpop.f32.mrb[0].mxu0
    %v325 = vadd.f32 0.0, %v324
    %v326 = vpop.f32.mrb[0].mxu0
    %327 = vdwg.mxu0
    %v328 = vadd.f32 %v253, %v325
    %v329 = vxor.u32 %v328, 2147483648
    %v330 = vmul.f32 %v329, 1.442695
    %v331 = vpow.pop %v330
    %v332 = vadd.f32 %v331, 1.0
    %v333 = vrcp.pop %v332
    %v334 = vmul.f32 1.0, %v333
    %v335 = vtanh.pop %v328
    %v338 = vunpack.c.l.s4 1983009808
    %v339 = vunpack.c.0.s8 %v338
    %v340 = vlaneseq
    %v341 = vshrl.u32 %v340, 7
    %v342 = vsub.s32 %v339, %v341
    %v343 = vrot.slane %v243, %v342
    %344 = vrot.lane.b32.xlu0 %v343, 32
    %v345 = vpop.permute.xlu0 %344
    %v347 = vmul.f32 %v334, %v345
    %349 = vrot.lane.b32.xlu0 %v335, 64
    %v350 = vpop.permute.xlu0 %349
    %v352 = vmul.f32 %v334, %v350
    %354 = vrot.lane.b32.xlu0 %v352, 32
    %v355 = vpop.permute.xlu0 %354
    %v357 = vadd.f32 %v347, %v355
    %v358 = vtanh.pop %v357
    %360 = vrot.lane.b32.xlu0 %v358, 64
    %v361 = vpop.permute.xlu0 %360
    %v363 = vmul.f32 %v334, %v361
    %v364 = vsel %vm250, 1, 0
    %365 = vset.pattern.permute.xlu0 0
    %366 = vperm.xlu0 %365, %v364
    %v367 = vpop.permute.xlu0 %366
    %vm368 = vcmp.eq.s32.totalorder %v367, 1
    %v371 = vunpack.c.l.s4 1983009808
    %v372 = vunpack.c.0.s8 %v371
    %v373 = vlaneseq
    %v374 = vshrl.u32 %v373, 7
    %v375 = vsub.s32 %v372, %v374
    %v376 = vrot.slane %v363, %v375
    %377 = vrot.lane.b32.xlu0 %v376, 32
    %v378 = vpop.permute.xlu0 %377
    %v380 = vsel %vm368, %v378, 0.0
    %s381 = scalar_lea.vmem %s8, %s247
    %vm382 = vcmask 254976
    %383 = vst.msk [vmem:[%s381] sm:$0x3] %vm382, %v380
    %v384 = vsel %vm368, %v378, %v242
    %v387 = vunpack.c.l.s4 1983009808
    %v388 = vunpack.c.0.s8 %v387
    %v389 = vlaneseq
    %v390 = vshrl.u32 %v389, 7
    %v391 = vsub.s32 %v388, %v390
    %v392 = vrot.slane %v357, %v391
    %393 = vrot.lane.b32.xlu0 %v392, 96
    %v394 = vpop.permute.xlu0 %393
    %v396 = vsel %vm368, %v394, %v243
    %s397 = smul.u32 %s246, 2
    %s398 = scalar_lea.vmem %s0, %s397
    %v399 = vld [vmem:[%s398] sm:$0x3]
    %vm400 = vcmp.gt.f32.partialorder %v399, 0.0
    %s401 = smul.addr %s397, 2
    %s402 = scalar_lea.vmem [#allocation2], %s401
    %v403 = vld [vmem:[%s402] sm:$0xf]
    %v405 = vsel %vm254, %v244, 0
    %407 = vmatprep.subr.mxu0 0.0
    %408 = vmatpush1.msra.mxu0 %v226
    %409 = vmatprep.subr.mxu0 0.0
    %410 = vmatpush1.msra.mxu0 %v227
    %411 = vmatprep.subr.mxu0 0.0
    %412 = vmatpush1.msra.mxu0 %v228
    %413 = vmatprep.subr.mxu0 0.0
    %414 = vmatpush1.msra.mxu0 %v229
    %415 = vmatprep.subr.mxu0 0.0
    %416 = vmatpush1.msra.mxu0 0.0
    %417 = vmatprep.subr.mxu0 0.0
    %418 = vmatpush1.msra.mxu0 0.0
    %419 = vmatprep.subr.mxu0 0.0
    %420 = vmatpush1.msra.mxu0 0.0
    %421 = vmatprep.subr.mxu0 0.0
    %422 = vmatpush1.msra.mxu0 0.0
    %423 = vmatprep.subr.mxu0 0.0
    %424 = vmatpush1.msra.mxu0 0.0
    %425 = vmatprep.subr.mxu0 0.0
    %426 = vmatpush1.msra.mxu0 0.0
    %427 = vmatprep.subr.mxu0 0.0
    %428 = vmatpush1.msra.mxu0 0.0
    %429 = vmatprep.subr.mxu0 0.0
    %430 = vmatpush1.msra.mxu0 0.0
    %431 = vmatprep.subr.mxu0 0.0
    %432 = vmatpush1.msra.mxu0 0.0
    %433 = vmatprep.subr.mxu0 0.0
    %434 = vmatpush1.msra.mxu0 0.0
    %435 = vmatprep.subr.mxu0 0.0
    %436 = vmatpush1.msra.mxu0 0.0
    %437 = vmatprep.subr.mxu0 0.0
    %438 = vmatpush1.msra.mxu0 0.0
    %439 = vmatprep.subr.mxu0 0.0
    %440 = vmatpush1.msra.mxu0 0.0
    %441 = vmatprep.subr.mxu0 0.0
    %442 = vmatpush1.msra.mxu0 0.0
    %443 = vmatprep.subr.mxu0 0.0
    %444 = vmatpush1.msra.mxu0 0.0
    %445 = vmatprep.subr.mxu0 0.0
    %446 = vmatpush1.msra.mxu0 0.0
    %447 = vmatprep.subr.mxu0 0.0
    %448 = vmatpush1.msra.mxu0 0.0
    %449 = vmatprep.subr.mxu0 0.0
    %450 = vmatpush1.msra.mxu0 0.0
    %451 = vmatprep.subr.mxu0 0.0
    %452 = vmatpush1.msra.mxu0 0.0
    %453 = vmatprep.subr.mxu0 0.0
    %454 = vmatpush1.msra.mxu0 0.0
    %455 = vmatprep.subr.mxu0 0.0
    %456 = vmatpush1.msra.mxu0 0.0
    %457 = vmatprep.subr.mxu0 0.0
    %458 = vmatpush1.msra.mxu0 0.0
    %459 = vmatprep.subr.mxu0 0.0
    %460 = vmatpush1.msra.mxu0 0.0
    %461 = vmatprep.subr.mxu0 0.0
    %462 = vmatpush1.msra.mxu0 0.0
    %463 = vmatprep.subr.mxu0 0.0
    %464 = vmatpush1.msra.mxu0 0.0
    %465 = vmatprep.subr.mxu0 0.0
    %466 = vmatpush1.msra.mxu0 0.0
    %467 = vmatprep.subr.mxu0 0.0
    %468 = vmatpush1.msra.mxu0 0.0
    %469 = vmatprep.subr.mxu0 0.0
    %470 = vmatpush1.msra.mxu0 0.0
    %471 = vmatprep.mubr.f32.mxu0 0.0
    %472 = vmatmul.mubr.f32.gmra.mrb[0].mxu0 %v405
    %v473 = vpop.f32.mrb[0].mxu0
    %v474 = vadd.f32 0.0, %v473
    %v475 = vpop.f32.mrb[0].mxu0
    %476 = vdwg.mxu0
    %v478 = vrot.slane %v403, 2
    %v480 = vadd.f32 %v478, %v474
    %v481 = vxor.u32 %v480, 2147483648
    %v482 = vmul.f32 %v481, 1.442695
    %v483 = vpow.pop %v482
    %v484 = vadd.f32 %v483, 1.0
    %v485 = vrcp.pop %v484
    %v486 = vmul.f32 1.0, %v485
    %v487 = vtanh.pop %v480
    %v490 = vunpack.c.l.s4 1983009808
    %v491 = vunpack.c.0.s8 %v490
    %v492 = vlaneseq
    %v493 = vshrl.u32 %v492, 7
    %v494 = vsub.s32 %v491, %v493
    %v495 = vrot.slane %v245, %v494
    %496 = vrot.lane.b32.xlu0 %v495, 32
    %v497 = vpop.permute.xlu0 %496
    %v499 = vmul.f32 %v486, %v497
    %501 = vrot.lane.b32.xlu0 %v487, 64
    %v502 = vpop.permute.xlu0 %501
    %v504 = vmul.f32 %v486, %v502
    %506 = vrot.lane.b32.xlu0 %v504, 32
    %v507 = vpop.permute.xlu0 %506
    %v509 = vadd.f32 %v499, %v507
    %v510 = vtanh.pop %v509
    %512 = vrot.lane.b32.xlu0 %v510, 64
    %v513 = vpop.permute.xlu0 %512
    %v515 = vmul.f32 %v486, %v513
    %v516 = vsel %vm400, 1, 0
    %517 = vset.pattern.permute.xlu0 0
    %518 = vperm.xlu0 %517, %v516
    %v519 = vpop.permute.xlu0 %518
    %vm520 = vcmp.eq.s32.totalorder %v519, 1
    %v523 = vunpack.c.l.s4 1983009808
    %v524 = vunpack.c.0.s8 %v523
    %v525 = vlaneseq
    %v526 = vshrl.u32 %v525, 7
    %v527 = vsub.s32 %v524, %v526
    %v528 = vrot.slane %v515, %v527
    %529 = vrot.lane.b32.xlu0 %v528, 32
    %v530 = vpop.permute.xlu0 %529
    %v532 = vsel %vm520, %v530, 0.0
    %534 = vrot.lane.b32.xlu0 %v532, 32
    %v535 = vpop.permute.xlu0 %534
    %s537 = scalar_lea.vmem %s8, %s397
    %vm538 = vcmask 517376
    %539 = vst.msk [vmem:[%s537] sm:$0x3] %vm538, %v535
    %v540 = vsel %vm520, %v530, %v244
    %v543 = vunpack.c.l.s4 1983009808
    %v544 = vunpack.c.0.s8 %v543
    %v545 = vlaneseq
    %v546 = vshrl.u32 %v545, 7
    %v547 = vsub.s32 %v544, %v546
    %v548 = vrot.slane %v509, %v547
    %549 = vrot.lane.b32.xlu0 %v548, 96
    %v550 = vpop.permute.xlu0 %549
    %v552 = vsel %vm520, %v550, %v245
  $region38: #{lstm_classifier_forward.3} parent=0 // loop_footer
    %s241 = sadd.s32 1, %s237
  $region39: #{lstm_classifier_forward.3} parent=0 // loop_footer_branch
    %236 = sbr.rel target = $region35
  $region40: #{lstm_classifier_forward.3} parent=0 // loop_exit
    _
  // Predicated region
  $region41: #{lstm_classifier_forward.3} parent=0 // pred_check
    _
  $region42: #{lstm_classifier_forward.3} parent=0 // pred_check_branch
    %554 = sbr.rel (0) target = $region44
  $region43: #{lstm_classifier_forward.3} parent=0 // pred_region
    _
  $region44: #{lstm_classifier_forward.3} parent=0 // pred_fallthru
    _
  // Predicated region
  $region45: #{lstm_classifier_forward.3} parent=0 // pred_check
    _
  $region46: #{lstm_classifier_forward.3} parent=0 // pred_check_branch
    %556 = sbr.rel (0) target = $region48
  $region47: #{lstm_classifier_forward.3} parent=0 // pred_region
    _
  $region48: #{lstm_classifier_forward.3} parent=0 // pred_fallthru
    _

</llo_original>
